<compile_context>
chip_gen: v6e
topology: v6e:2x2x1
jax: 0.10.0
libtpu: 0.0.40
codegen_flags: <defaults>
</compile_context>

<pallas_src>
import math

import jax
import jax.numpy as jnp
from jax.experimental import pallas as pl
from jax.experimental.pallas import tpu as pltpu


def make_mta_kernel(num_heads, embed_time_k, block_b, lq, lk, input_dim, nh_pad):
    scale = 1.0 / math.sqrt(embed_time_k)
    dk = embed_time_k
    H = num_heads
    T = H * dk
    D = input_dim
    lqk = lq + lk

    def kernel(qk_ref, v_ref, mask_ref, wqk_ref, bq_ref, bk_ref,
               wo_ref, bo_ref, out_ref):
        Bt = block_b

        # ---- Fused Q/K projection: ONE matmul over the row-stacked (q; k) slab.
        # (Bt*(Lq+Lk), T) @ (T, 2T) -> q lives in the first Lq rows / first T
        # lanes, k in the remaining Lk rows / last T lanes.
        qk2 = qk_ref[...].reshape(Bt * lqk, T)
        proj = jnp.dot(qk2, wqk_ref[...], preferred_element_type=jnp.float32)
        proj = proj.reshape(Bt, lqk, 2 * T)
        qp = (proj[:, :lq, :T] + bq_ref[...]) * scale      # (Bt, Lq, T); 1/sqrt(dk) folded
        kp = proj[:, lq:, T:] + bk_ref[...]                # (Bt, Lk, T)

        v = v_ref[...]          # (Bt, Lk, D)
        msk = mask_ref[...]     # (Bt, Lk, D), strictly binary {0, 1}
        # Fused num/den operand: one (Bt, Lk, 2D) rhs gives both the masked
        # weighted sums (first D lanes) and the masked normalizers (last D).
        mvm = jnp.concatenate([msk * v, msk], axis=-1)     # (Bt, Lk, 2D)
        # Fully-masked channel fallback: the reference's softmax over a row of
        # -1e9 degenerates to uniform weights -> mean of v over ALL keys.
        v_mean = jnp.mean(v, axis=1, keepdims=True)        # (Bt, 1, D)

        # ---- Scores + exp per head, stacked along the sublane (query) axis so
        # that a single batched matmul below serves every head at once.
        e_parts = []
        for h in range(H):
            lo = h * dk
            qh = qp[:, :, lo:lo + dk]                      # (Bt, Lq, dk)
            kh = kp[:, :, lo:lo + dk]                      # (Bt, Lk, dk)
            # Last-dim-contracting einsum -> MXU consumes K with no transpose.
            s = jnp.einsum("bqc,bkc->bqk", qh, kh,
                           preferred_element_type=jnp.float32)   # (Bt, Lq, Lk)
            # Global (unmasked) row max: shift-invariant since masked keys are
            # zeroed by the matmul against `msk`.  NOTE: if score spreads ever
            # approach the f32 exp range (~88) a masked per-channel max would
            # be needed to avoid a spurious den==0 fallback.
            m = jnp.max(s, axis=-1, keepdims=True)
            e_parts.append(jnp.exp(s - m))
        e = e_parts[0] if H == 1 else jnp.concatenate(e_parts, axis=1)  # (Bt, H*Lq, Lk)

        # ---- One batched matmul for numerators AND denominators of all heads.
        att = jnp.einsum("bqk,bkx->bqx", e, mvm,
                         preferred_element_type=jnp.float32)     # (Bt, H*Lq, 2D)
        num = att[..., :D]
        den = att[..., D:]
        valid = den > 0.0
        # EUP approximate reciprocal: keeps the divide off the VALU path.
        rec = pl.reciprocal(jnp.where(valid, den, 1.0), approx=True)
        x = jnp.where(valid, num * rec, v_mean)                  # (Bt, H*Lq, D)

        # ---- Output projection.  Instead of relayouting to (Bt, Lq, H*D) and
        # doing one matmul, accumulate each head's slice against its D rows of
        # Wo^T: folds the head-concat into the matmul with no lane shuffle.
        wo = wo_ref[...]                                         # (H*D, nh_pad)
        acc = None
        for h in range(H):
            xh = x[:, h * lq:(h + 1) * lq, :].reshape(Bt * lq, D)
            part = jnp.dot(xh, wo[h * D:(h + 1) * D, :],
                           preferred_element_type=jnp.float32)
            acc = part if acc is None else acc + part
        out = acc + bo_ref[...]                                  # (Bt*Lq, nh_pad)

        # 128-lane-padded, unmasked store; leading-dim split only (no relayout).
        out_ref[...] = out.reshape(Bt, lq, nh_pad)

    return kernel


def _is_v7x():
    try:
        kind = jax.devices()[0].device_kind.lower()
        return ("v7" in kind) or ("7x" in kind)
    except Exception:
        return False


def multi_time_attention_pallas(query, key, value, mask, params,
                                num_heads, embed_time, nhidden, block_b=None):
    B, Lq, T = query.shape
    _, Lk, D = value.shape
    assert T == embed_time and embed_time % num_heads == 0
    dk = embed_time // num_heads
    nh_pad = ((nhidden + 127) // 128) * 128
    lqk = Lq + Lk

    # ---- Batch-block heuristic.
    # Tall projection slabs / few grid steps amortize per-step overhead; the
    # ">= 2 parallel steps" cap is only useful on v7x (2 TensorCores).  block_b
    # is also bounded by a per-step VMEM estimate (double-buffered in/out
    # blocks + in-kernel intermediates), which matters on v7x's 64 MiB VMEM.
    per_row = 4 * (2 * lqk * T                    # qk block (x2 buffers)
                   + 4 * Lk * D                   # value + mask (x2 buffers)
                   + 2 * Lq * nh_pad              # output block (x2 buffers)
                   + lqk * 2 * T                  # projection intermediate
                   + 2 * num_heads * Lq * Lk      # scores + exp
                   + Lq * nh_pad                  # projection output
                   + 8 * Lq * D)                  # att / num / den / misc
    vmem_budget = 16 * 1024 * 1024
    max_bb = max(1, vmem_budget // max(per_row, 1))
    if block_b is None:
        block_b = max(1, 2048 // max(lqk, 1))
        if _is_v7x() and B >= 2:
            block_b = min(block_b, (B + 1) // 2)
        block_b = min(block_b, B)
    block_b = max(1, min(block_b, max_bb))

    # Pad batch to a multiple of block_b (padded rows have mask == 0; the
    # den==0 fallback keeps them finite and they are sliced off below).
    B_pad = ((B + block_b - 1) // block_b) * block_b
    if B_pad != B:
        pad = B_pad - B
        query = jnp.pad(query, ((0, pad), (0, 0), (0, 0)))
        key = jnp.pad(key, ((0, pad), (0, 0), (0, 0)))
        value = jnp.pad(value, ((0, pad), (0, 0), (0, 0)))
        mask = jnp.pad(mask, ((0, pad), (0, 0), (0, 0)))

    # Stack query/key along the sequence axis and the two projection weights
    # along the output axis -> one fused projection matmul in the kernel.
    qk = jnp.concatenate([query, key], axis=1)                         # (B_pad, Lq+Lk, T)
    wqk_t = jnp.concatenate([params["wq"].T, params["wk"].T], axis=1)  # (T, 2T)
    bq = params["bq"].reshape(1, T)
    bk = params["bk"].reshape(1, T)
    # Pad the output projection to 128 lanes -> full-width unmasked stores.
    wo_t = jnp.pad(params["wo"].T, ((0, 0), (0, nh_pad - nhidden)))    # (H*D, nh_pad)
    bo = jnp.pad(params["bo"], (0, nh_pad - nhidden)).reshape(1, nh_pad)

    kernel = make_mta_kernel(num_heads, dk, block_b, Lq, Lk, D, nh_pad)

    in_specs = [
        pl.BlockSpec((block_b, lqk, T), lambda b: (b, 0, 0)),     # [query; key]
        pl.BlockSpec((block_b, Lk, D), lambda b: (b, 0, 0)),      # value
        pl.BlockSpec((block_b, Lk, D), lambda b: (b, 0, 0)),      # mask
        # Weights/biases are grid-invariant (constant index maps skip re-DMA).
        pl.BlockSpec((T, 2 * T), lambda b: (0, 0)),               # [Wq^T | Wk^T]
        pl.BlockSpec((1, T), lambda b: (0, 0)),                   # bq
        pl.BlockSpec((1, T), lambda b: (0, 0)),                   # bk
        pl.BlockSpec((num_heads * D, nh_pad), lambda b: (0, 0)),  # Wo^T (lane-padded)
        pl.BlockSpec((1, nh_pad), lambda b: (0, 0)),              # bo (lane-padded)
    ]
    out_spec = pl.BlockSpec((block_b, Lq, nh_pad), lambda b: (b, 0, 0))

    out = pl.pallas_call(
        kernel,
        out_shape=jax.ShapeDtypeStruct((B_pad, Lq, nh_pad), jnp.float32),
        grid_spec=pltpu.PrefetchScalarGridSpec(
            num_scalar_prefetch=0,
            grid=(B_pad // block_b,),
            in_specs=in_specs,
            out_specs=out_spec,
        ),
        compiler_params=pltpu.CompilerParams(
            dimension_semantics=("parallel",),
            vmem_limit_bytes=48 * 1024 * 1024,
        ),
    )(qk, value, mask, wqk_t, bq, bk, wo_t, bo)

    return out[:B, :, :nhidden]


def multi_time_attention_ref(query, key, value, mask, params,
                             num_heads, embed_time, nhidden):
    """Pure-JAX reference mirroring the PyTorch forward exactly."""
    B, Lk, D = value.shape
    Lq = query.shape[1]
    dk = embed_time // num_heads

    def linear(x, w, b):
        return x @ w.T + b

    qp = linear(query, params["wq"], params["bq"]).reshape(B, Lq, num_heads, dk)
    qp = jnp.transpose(qp, (0, 2, 1, 3))                        # (B, H, Lq, dk)
    kp = linear(key, params["wk"], params["bk"]).reshape(B, Lk, num_heads, dk)
    kp = jnp.transpose(kp, (0, 2, 1, 3))                        # (B, H, Lk, dk)

    scores = jnp.einsum("bhqd,bhkd->bhqk", qp, kp) / math.sqrt(dk)
    scores = jnp.repeat(scores[..., None], D, axis=-1)          # (B, H, Lq, Lk, D)
    m = mask[:, None, None, :, :]                               # (B, 1, 1, Lk, D)
    scores = jnp.where(m == 0.0, -1e9, scores)
    p = jax.nn.softmax(scores, axis=-2)
    x = jnp.sum(p * value[:, None, None, :, :], axis=-2)        # (B, H, Lq, D)
    x = jnp.transpose(x, (0, 2, 1, 3)).reshape(B, Lq, num_heads * D)
    return linear(x, params["wo"], params["bo"])


if __name__ == "__main__":
    # Module hyperparameters (small, consistent with the PyTorch __init__).
    input_dim = 4        # "dim" / feature channels of value
    embed_time = 16
    num_heads = 2
    nhidden = 32
    B, Lq, Lk = 4, 8, 8

    key0 = jax.random.PRNGKey(0)
    keys = jax.random.split(key0, 10)

    # Deterministic synthetic parameters (PyTorch Linear weight shape = (out, in)).
    params = {
        "wq": 0.1 * jax.random.normal(keys[0], (embed_time, embed_time), jnp.float32),
        "bq": 0.1 * jax.random.normal(keys[1], (embed_time,), jnp.float32),
        "wk": 0.1 * jax.random.normal(keys[2], (embed_time, embed_time), jnp.float32),
        "bk": 0.1 * jax.random.normal(keys[3], (embed_time,), jnp.float32),
        "wo": 0.1 * jax.random.normal(keys[4], (nhidden, input_dim * num_heads), jnp.float32),
        "bo": 0.1 * jax.random.normal(keys[5], (nhidden,), jnp.float32),
    }

    query = jax.random.normal(keys[6], (B, Lq, embed_time), jnp.float32)
    key_in = jax.random.normal(keys[7], (B, Lk, embed_time), jnp.float32)
    value = jax.random.normal(keys[8], (B, Lk, input_dim), jnp.float32)
    mask = jax.random.bernoulli(keys[9], 0.8, (B, Lk, input_dim)).astype(jnp.float32)

    out = multi_time_attention_pallas(query, key_in, value, mask, params,
                                      num_heads, embed_time, nhidden)
    out = jax.block_until_ready(out)

    ref = multi_time_attention_ref(query, key_in, value, mask, params,
                                   num_heads, embed_time, nhidden)
    assert out.shape == (B, Lq, nhidden)
    # Tolerance accommodates the EUP approximate reciprocal used in the kernel
    # (dominant term of the error budget); structure errors would be >> 1e-3.
    assert jnp.allclose(out, ref, atol=1e-3, rtol=1e-3), (
        f"max abs diff {jnp.max(jnp.abs(out - ref))}")

    print("KERNEL_OK")
</pallas_src>

<mosaic_0001>
module attributes {stable_mosaic.version = 11 : i64} {
  func.func @kernel(%arg0: i32, %arg1: memref<4x16x16xf32, #tpu.memory_space<vmem>>, %arg2: memref<4x8x4xf32, #tpu.memory_space<vmem>>, %arg3: memref<4x8x4xf32, #tpu.memory_space<vmem>>, %arg4: memref<16x32xf32, #tpu.memory_space<vmem>>, %arg5: memref<1x16xf32, #tpu.memory_space<vmem>>, %arg6: memref<1x16xf32, #tpu.memory_space<vmem>>, %arg7: memref<8x128xf32, #tpu.memory_space<vmem>>, %arg8: memref<1x128xf32, #tpu.memory_space<vmem>>, %arg9: memref<4x8x128xf32, #tpu.memory_space<vmem>>) attributes {dimension_semantics = [#tpu.dimension_semantics<parallel>], iteration_bounds = array<i64: 1>, scalar_prefetch = 0 : i64, scratch_operands = 0 : i64, tpu.core_type = #tpu.core_type<tc>, window_params = [{transform_indices = @transform_0, window_bounds = array<i64: 4, 16, 16>}, {transform_indices = @transform_1, window_bounds = array<i64: 4, 8, 4>}, {transform_indices = @transform_2, window_bounds = array<i64: 4, 8, 4>}, {pipeline_mode = #tpu.pipeline_mode<synchronous>, transform_indices = @transform_3, window_bounds = array<i64: 16, 32>}, {pipeline_mode = #tpu.pipeline_mode<synchronous>, transform_indices = @transform_4, window_bounds = array<i64: 1, 16>}, {pipeline_mode = #tpu.pipeline_mode<synchronous>, transform_indices = @transform_5, window_bounds = array<i64: 1, 16>}, {pipeline_mode = #tpu.pipeline_mode<synchronous>, transform_indices = @transform_6, window_bounds = array<i64: 8, 128>}, {pipeline_mode = #tpu.pipeline_mode<synchronous>, transform_indices = @transform_7, window_bounds = array<i64: 1, 128>}, {transform_indices = @transform_8, window_bounds = array<i64: 4, 8, 128>}]} {
    %c0 = arith.constant 0 : index
    %c0_0 = arith.constant 0 : index
    %c0_1 = arith.constant 0 : index
    %0 = vector.load %arg1[%c0, %c0_0, %c0_1] : memref<4x16x16xf32, #tpu.memory_space<vmem>>, vector<4x16x16xf32>
    %1 = vector.shape_cast %0 : vector<4x16x16xf32> to vector<64x16xf32>
    %c0_2 = arith.constant 0 : index
    %c0_3 = arith.constant 0 : index
    %2 = vector.load %arg4[%c0_2, %c0_3] : memref<16x32xf32, #tpu.memory_space<vmem>>, vector<16x32xf32>
    %cst = arith.constant dense<0.000000e+00> : vector<64x32xf32>
    %3 = tpu.matmul %1, %2, %cst {dimension_numbers = #tpu.dot_dimension_numbers<[1], [0], [0], [1], [0, 0, 1, 1], [], []>} : vector<64x16xf32>, vector<16x32xf32>, vector<64x32xf32> -> vector<64x32xf32>
    %4 = vector.shape_cast %3 : vector<64x32xf32> to vector<4x16x32xf32>
    %5 = vector.extract_strided_slice %4 {offsets = [0, 0, 0], sizes = [4, 8, 16], strides = [1, 1, 1]} : vector<4x16x32xf32> to vector<4x8x16xf32>
    %c0_4 = arith.constant 0 : index
    %c0_5 = arith.constant 0 : index
    %6 = vector.load %arg5[%c0_4, %c0_5] : memref<1x16xf32, #tpu.memory_space<vmem>>, vector<1x16xf32>
    %7 = vector.shape_cast %6 : vector<1x16xf32> to vector<1x1x16xf32>
    %8 = vector.broadcast %7 : vector<1x1x16xf32> to vector<4x8x16xf32>
    %9 = arith.addf %5, %8 : vector<4x8x16xf32>
    %cst_6 = arith.constant 0.353553385 : f32
    %10 = vector.broadcast %cst_6 : f32 to vector<4x8x16xf32>
    %11 = arith.mulf %9, %10 : vector<4x8x16xf32>
    %12 = vector.extract_strided_slice %4 {offsets = [0, 8, 16], sizes = [4, 8, 16], strides = [1, 1, 1]} : vector<4x16x32xf32> to vector<4x8x16xf32>
    %c0_7 = arith.constant 0 : index
    %c0_8 = arith.constant 0 : index
    %13 = vector.load %arg6[%c0_7, %c0_8] : memref<1x16xf32, #tpu.memory_space<vmem>>, vector<1x16xf32>
    %14 = vector.shape_cast %13 : vector<1x16xf32> to vector<1x1x16xf32>
    %15 = vector.broadcast %14 : vector<1x1x16xf32> to vector<4x8x16xf32>
    %16 = arith.addf %12, %15 : vector<4x8x16xf32>
    %c0_9 = arith.constant 0 : index
    %c0_10 = arith.constant 0 : index
    %c0_11 = arith.constant 0 : index
    %17 = vector.load %arg2[%c0_9, %c0_10, %c0_11] : memref<4x8x4xf32, #tpu.memory_space<vmem>>, vector<4x8x4xf32>
    %c0_12 = arith.constant 0 : index
    %c0_13 = arith.constant 0 : index
    %c0_14 = arith.constant 0 : index
    %18 = vector.load %arg3[%c0_12, %c0_13, %c0_14] : memref<4x8x4xf32, #tpu.memory_space<vmem>>, vector<4x8x4xf32>
    %19 = arith.mulf %18, %17 : vector<4x8x4xf32>
    %20 = tpu.concatenate %19, %18 in 2 : vector<4x8x4xf32>, vector<4x8x4xf32> -> vector<4x8x8xf32>
    %cst_15 = arith.constant dense<0.000000e+00> : vector<4x4xf32>
    %21 = vector.multi_reduction <add>, %17, %cst_15 [1] : vector<4x8x4xf32> to vector<4x4xf32>
    %22 = vector.shape_cast %21 : vector<4x4xf32> to vector<4x1x4xf32>
    %cst_16 = arith.constant 8.000000e+00 : f32
    %23 = vector.broadcast %cst_16 : f32 to vector<4x1x4xf32>
    %24 = arith.divf %22, %23 : vector<4x1x4xf32>
    %25 = vector.extract_strided_slice %11 {offsets = [0, 0, 0], sizes = [4, 8, 8], strides = [1, 1, 1]} : vector<4x8x16xf32> to vector<4x8x8xf32>
    %26 = vector.extract_strided_slice %16 {offsets = [0, 0, 0], sizes = [4, 8, 8], strides = [1, 1, 1]} : vector<4x8x16xf32> to vector<4x8x8xf32>
    "tpu.trace_start"() <{level = 10 : i32, message = "bqc,bkc->bqk"}> : () -> ()
    %cst_17 = arith.constant dense<0.000000e+00> : vector<4x8x8xf32>
    %27 = tpu.matmul %25, %26, %cst_17 {dimension_numbers = #tpu.dot_dimension_numbers<[2], [2], [1], [1], [0, 0, 0, 1, 1, 1], [0], [0]>} : vector<4x8x8xf32>, vector<4x8x8xf32>, vector<4x8x8xf32> -> vector<4x8x8xf32>
    "tpu.trace_stop"() : () -> ()
    %cst_18 = arith.constant dense<0xFF800000> : vector<4x8xf32>
    %28 = vector.multi_reduction <maximumf>, %27, %cst_18 [2] : vector<4x8x8xf32> to vector<4x8xf32>
    %29 = vector.shape_cast %28 : vector<4x8xf32> to vector<4x8x1xf32>
    %30 = vector.broadcast %29 : vector<4x8x1xf32> to vector<4x8x8xf32>
    %31 = arith.subf %27, %30 : vector<4x8x8xf32>
    %32 = math.exp %31 : vector<4x8x8xf32>
    %33 = vector.extract_strided_slice %11 {offsets = [0, 0, 8], sizes = [4, 8, 8], strides = [1, 1, 1]} : vector<4x8x16xf32> to vector<4x8x8xf32>
    %34 = vector.extract_strided_slice %16 {offsets = [0, 0, 8], sizes = [4, 8, 8], strides = [1, 1, 1]} : vector<4x8x16xf32> to vector<4x8x8xf32>
    "tpu.trace_start"() <{level = 10 : i32, message = "bqc,bkc->bqk"}> : () -> ()
    %cst_19 = arith.constant dense<0.000000e+00> : vector<4x8x8xf32>
    %35 = tpu.matmul %33, %34, %cst_19 {dimension_numbers = #tpu.dot_dimension_numbers<[2], [2], [1], [1], [0, 0, 0, 1, 1, 1], [0], [0]>} : vector<4x8x8xf32>, vector<4x8x8xf32>, vector<4x8x8xf32> -> vector<4x8x8xf32>
    "tpu.trace_stop"() : () -> ()
    %cst_20 = arith.constant dense<0xFF800000> : vector<4x8xf32>
    %36 = vector.multi_reduction <maximumf>, %35, %cst_20 [2] : vector<4x8x8xf32> to vector<4x8xf32>
    %37 = vector.shape_cast %36 : vector<4x8xf32> to vector<4x8x1xf32>
    %38 = vector.broadcast %37 : vector<4x8x1xf32> to vector<4x8x8xf32>
    %39 = arith.subf %35, %38 : vector<4x8x8xf32>
    %40 = math.exp %39 : vector<4x8x8xf32>
    %41 = tpu.concatenate %32, %40 in 1 : vector<4x8x8xf32>, vector<4x8x8xf32> -> vector<4x16x8xf32>
    "tpu.trace_start"() <{level = 10 : i32, message = "bqk,bkx->bqx"}> : () -> ()
    %cst_21 = arith.constant dense<0.000000e+00> : vector<4x16x8xf32>
    %42 = tpu.matmul %41, %20, %cst_21 {dimension_numbers = #tpu.dot_dimension_numbers<[2], [1], [1], [2], [0, 0, 0, 1, 1, 2], [0], [0]>} : vector<4x16x8xf32>, vector<4x8x8xf32>, vector<4x16x8xf32> -> vector<4x16x8xf32>
    "tpu.trace_stop"() : () -> ()
    %43 = vector.extract_strided_slice %42 {offsets = [0, 0, 0], sizes = [4, 16, 4], strides = [1, 1, 1]} : vector<4x16x8xf32> to vector<4x16x4xf32>
    %44 = vector.extract_strided_slice %42 {offsets = [0, 0, 4], sizes = [4, 16, 4], strides = [1, 1, 1]} : vector<4x16x8xf32> to vector<4x16x4xf32>
    %cst_22 = arith.constant 0.000000e+00 : f32
    %45 = vector.broadcast %cst_22 : f32 to vector<4x16x4xf32>
    %46 = arith.cmpf ogt, %44, %45 : vector<4x16x4xf32>
    %cst_23 = arith.constant 1.000000e+00 : f32
    %47 = vector.broadcast %cst_23 : f32 to vector<4x16x4xf32>
    %48 = arith.select %46, %44, %47 : vector<4x16x4xi1>, vector<4x16x4xf32>
    %49 = tpu.reciprocal %48 {approx = true} : vector<4x16x4xf32> -> vector<4x16x4xf32>
    %50 = arith.mulf %43, %49 : vector<4x16x4xf32>
    %51 = vector.shape_cast %24 : vector<4x1x4xf32> to vector<4x1x4xf32>
    %52 = vector.broadcast %51 : vector<4x1x4xf32> to vector<4x16x4xf32>
    %53 = arith.select %46, %50, %52 : vector<4x16x4xi1>, vector<4x16x4xf32>
    %c0_24 = arith.constant 0 : index
    %c0_25 = arith.constant 0 : index
    %54 = vector.load %arg7[%c0_24, %c0_25] : memref<8x128xf32, #tpu.memory_space<vmem>>, vector<8x128xf32>
    %55 = vector.extract_strided_slice %53 {offsets = [0, 0, 0], sizes = [4, 8, 4], strides = [1, 1, 1]} : vector<4x16x4xf32> to vector<4x8x4xf32>
    %56 = vector.shape_cast %55 : vector<4x8x4xf32> to vector<32x4xf32>
    %57 = vector.extract_strided_slice %54 {offsets = [0, 0], sizes = [4, 128], strides = [1, 1]} : vector<8x128xf32> to vector<4x128xf32>
    %cst_26 = arith.constant dense<0.000000e+00> : vector<32x128xf32>
    %58 = tpu.matmul %56, %57, %cst_26 {dimension_numbers = #tpu.dot_dimension_numbers<[1], [0], [0], [1], [0, 0, 1, 1], [], []>} : vector<32x4xf32>, vector<4x128xf32>, vector<32x128xf32> -> vector<32x128xf32>
    %59 = vector.extract_strided_slice %53 {offsets = [0, 8, 0], sizes = [4, 8, 4], strides = [1, 1, 1]} : vector<4x16x4xf32> to vector<4x8x4xf32>
    %60 = vector.shape_cast %59 : vector<4x8x4xf32> to vector<32x4xf32>
    %61 = vector.extract_strided_slice %54 {offsets = [4, 0], sizes = [4, 128], strides = [1, 1]} : vector<8x128xf32> to vector<4x128xf32>
    %cst_27 = arith.constant dense<0.000000e+00> : vector<32x128xf32>
    %62 = tpu.matmul %60, %61, %cst_27 {dimension_numbers = #tpu.dot_dimension_numbers<[1], [0], [0], [1], [0, 0, 1, 1], [], []>} : vector<32x4xf32>, vector<4x128xf32>, vector<32x128xf32> -> vector<32x128xf32>
    %63 = arith.addf %58, %62 : vector<32x128xf32>
    %c0_28 = arith.constant 0 : index
    %c0_29 = arith.constant 0 : index
    %64 = vector.load %arg8[%c0_28, %c0_29] : memref<1x128xf32, #tpu.memory_space<vmem>>, vector<1x128xf32>
    %65 = vector.broadcast %64 : vector<1x128xf32> to vector<32x128xf32>
    %66 = arith.addf %63, %65 : vector<32x128xf32>
    %67 = vector.shape_cast %66 : vector<32x128xf32> to vector<4x8x128xf32>
    %c0_30 = arith.constant 0 : index
    %c0_31 = arith.constant 0 : index
    %c0_32 = arith.constant 0 : index
    %68 = vector.load %arg9[%c0_30, %c0_31, %c0_32] : memref<4x8x128xf32, #tpu.memory_space<vmem>>, vector<4x8x128xf32>
    tpu.vector_store %arg9[%c0_30, %c0_31, %c0_32], %67 {strides = array<i32>} : memref<4x8x128xf32, #tpu.memory_space<vmem>>, vector<4x8x128xf32>,
    return
  }
  func.func @transform_0(%arg0: i32) -> (i32, i32, i32) {
    %c0_i32 = arith.constant 0 : i32
    %c0_i32_0 = arith.constant 0 : i32
    %c0_i32_1 = arith.constant 0 : i32
    return %arg0, %c0_i32, %c0_i32_0 : i32, i32, i32
  }
  func.func @transform_1(%arg0: i32) -> (i32, i32, i32) {
    %c0_i32 = arith.constant 0 : i32
    %c0_i32_0 = arith.constant 0 : i32
    %c0_i32_1 = arith.constant 0 : i32
    return %arg0, %c0_i32, %c0_i32_0 : i32, i32, i32
  }
  func.func @transform_2(%arg0: i32) -> (i32, i32, i32) {
    %c0_i32 = arith.constant 0 : i32
    %c0_i32_0 = arith.constant 0 : i32
    %c0_i32_1 = arith.constant 0 : i32
    return %arg0, %c0_i32, %c0_i32_0 : i32, i32, i32
  }
  func.func @transform_3(%arg0: i32) -> (i32, i32) {
    %c0_i32 = arith.constant 0 : i32
    %c0_i32_0 = arith.constant 0 : i32
    %c0_i32_1 = arith.constant 0 : i32
    return %c0_i32, %c0_i32_0 : i32, i32
  }
  func.func @transform_4(%arg0: i32) -> (i32, i32) {
    %c0_i32 = arith.constant 0 : i32
    %c0_i32_0 = arith.constant 0 : i32
    %c0_i32_1 = arith.constant 0 : i32
    return %c0_i32, %c0_i32_0 : i32, i32
  }
  func.func @transform_5(%arg0: i32) -> (i32, i32) {
    %c0_i32 = arith.constant 0 : i32
    %c0_i32_0 = arith.constant 0 : i32
    %c0_i32_1 = arith.constant 0 : i32
    return %c0_i32, %c0_i32_0 : i32, i32
  }
  func.func @transform_6(%arg0: i32) -> (i32, i32) {
    %c0_i32 = arith.constant 0 : i32
    %c0_i32_0 = arith.constant 0 : i32
    %c0_i32_1 = arith.constant 0 : i32
    return %c0_i32, %c0_i32_0 : i32, i32
  }
  func.func @transform_7(%arg0: i32) -> (i32, i32) {
    %c0_i32 = arith.constant 0 : i32
    %c0_i32_0 = arith.constant 0 : i32
    %c0_i32_1 = arith.constant 0 : i32
    return %c0_i32, %c0_i32_0 : i32, i32
  }
  func.func @transform_8(%arg0: i32) -> (i32, i32, i32) {
    %c0_i32 = arith.constant 0 : i32
    %c0_i32_0 = arith.constant 0 : i32
    %c0_i32_1 = arith.constant 0 : i32
    return %arg0, %c0_i32, %c0_i32_0 : i32, i32, i32
  }
}

</mosaic_0001>

<llo_original>
// kernel: tpu_custom_call.1
$region0: #{tpu_custom_call.1}
  #allocation0 [shape = 'u32[]', space=smem, size = 0x4, offset = 0x4, fixed_abs, tag = 'smem constant byte address 0x4 - core index']
  #allocation1 [shape = 'u32[144,128]{1,0:T(1,128)}', space=vmem, size = 0x12000, scoped, tag = 'internal scratch']
  %s0 = inlined_call_operand.vmem [shape: f32[4,16,16], index: 0, kind: input, shape index: {}]
  %s1 = inlined_call_operand.vmem [shape: f32[4,8,4], index: 1, kind: input, shape index: {}]
  %s2 = inlined_call_operand.vmem [shape: f32[4,8,4], index: 2, kind: input, shape index: {}]
  %s3 = inlined_call_operand.vmem [shape: f32[16,32], index: 3, kind: input, shape index: {}]
  %s4 = inlined_call_operand.vmem [shape: f32[1,16], index: 4, kind: input, shape index: {}]
  %s5 = inlined_call_operand.hbm [shape: f32[1,16], index: 5, kind: input, shape index: {}]
  %s6 = inlined_call_operand.vmem [shape: f32[8,128], index: 6, kind: input, shape index: {}]
  %s7 = inlined_call_operand.vmem [shape: f32[1,128], index: 7, kind: input, shape index: {}]
  %s8 = inlined_call_operand.hbm [shape: f32[4,8,128], index: 8, kind: output, shape index: {}]
  %s9 = sld [smem:[#allocation0]]
  $region46: #{tpu_custom_call.1} parent=0
    _
  %s11 = ssub.s32 1, %s9
  %s12 = scalar_select 0, %s11, %s9
  $region1: #{tpu_custom_call.1} parent=0
    #allocation2 [shape = 'u8[512]{0}', space=vmem, size = 0x400, scoped, tag = 'input window, operand 5, single buffered']
    #allocation3 [shape = 's32[1]{0}', space=sflag, size = 0x4, scoped, tag = 'scoped memory for tpu_custom_call.1']
    #allocation4 [shape = 's32[1]{0}', space=sflag, size = 0x4, scoped, tag = 'scoped memory for tpu_custom_call.1']
    #allocation5 [shape = 'u8[16384]{0}', space=vmem, size = 0x4000, scoped, tag = 'output window, operand 0, single buffered']
    %13 = vsyncpa [#allocation3], 0
    %14 = vsyncpa [#allocation4], 0
    // Predicated region
    $region2: #{tpu_custom_call.1} parent=1 // pred_check
      _
    $region3: #{tpu_custom_call.1} parent=1 // pred_check_branch
      %16 = sbr.rel (0) target = $region5
    $region4: #{tpu_custom_call.1} parent=1 // pred_region
      _
    $region5: #{tpu_custom_call.1} parent=1 // pred_fallthru
      _
    // Predicated region
    $region6: #{tpu_custom_call.1} parent=1 // pred_check
      _
    $region7: #{tpu_custom_call.1} parent=1 // pred_check_branch
      %18 = sbr.rel (0) target = $region9
    $region8: #{tpu_custom_call.1} parent=1 // pred_region
      _
    $region9: #{tpu_custom_call.1} parent=1 // pred_fallthru
      _
    // Predicated region
    $region10: #{tpu_custom_call.1} parent=1 // pred_check
      _
    $region11: #{tpu_custom_call.1} parent=1 // pred_check_branch
      %20 = sbr.rel (0) target = $region13
    $region12: #{tpu_custom_call.1} parent=1 // pred_region
      _
    $region13: #{tpu_custom_call.1} parent=1 // pred_fallthru
      _
    // Predicated region
    $region14: #{tpu_custom_call.1} parent=1 // pred_check
      _
    $region15: #{tpu_custom_call.1} parent=1 // pred_check_branch
      %22 = sbr.rel (0) target = $region17
    $region16: #{tpu_custom_call.1} parent=1 // pred_region
      _
    $region17: #{tpu_custom_call.1} parent=1 // pred_fallthru
      _
    // Predicated region
    $region18: #{tpu_custom_call.1} parent=1 // pred_check
      _
    $region19: #{tpu_custom_call.1} parent=1 // pred_check_branch
      %24 = sbr.rel (0) target = $region21
    $region20: #{tpu_custom_call.1} parent=1 // pred_region
      _
    $region21: #{tpu_custom_call.1} parent=1 // pred_fallthru
      _
    // Predicated region
    $region22: #{tpu_custom_call.1} parent=1 // pred_check
      _
    $region23: #{tpu_custom_call.1} parent=1 // pred_check_branch
      %26 = sbr.rel (0) target = $region25
    $region24: #{tpu_custom_call.1} parent=1 // pred_region
      %s28 = ssub.s32 16, 16
      %29 = vsyncadd [#allocation3], %s28
      %s31 = sshll.u32 [#allocation2], 4
      %s32 = int_to_ptr.vmem [resolvable:$true] %s31
      %34 = dma.hbm_to_vmem [thread:$0]  %s5, 16, %s32, [#allocation3]
    $region25: #{tpu_custom_call.1} parent=1 // pred_fallthru
      _
    // Predicated region
    $region26: #{tpu_custom_call.1} parent=1 // pred_check
      _
    $region27: #{tpu_custom_call.1} parent=1 // pred_check_branch
      %36 = sbr.rel (0) target = $region29
    $region28: #{tpu_custom_call.1} parent=1 // pred_region
      _
    $region29: #{tpu_custom_call.1} parent=1 // pred_fallthru
      _
    // Predicated region
    $region30: #{tpu_custom_call.1} parent=1 // pred_check
      _
    $region31: #{tpu_custom_call.1} parent=1 // pred_check_branch
      %38 = sbr.rel (0) target = $region33
    $region32: #{tpu_custom_call.1} parent=1 // pred_region
      _
    $region33: #{tpu_custom_call.1} parent=1 // pred_fallthru
      _
    // Predicated region
    $region34: #{tpu_custom_call.1} parent=1 // pred_check
      _
    $region35: #{tpu_custom_call.1} parent=1 // pred_check_branch
      %40 = sbr.rel (0) target = $region37
    $region36: #{tpu_custom_call.1} parent=1 // pred_region
      %41 = dma.done [#allocation3], 16
    $region37: #{tpu_custom_call.1} parent=1 // pred_fallthru
      _
    %v42 = vld [vmem:[%s0] sm:$0xff]
    %v43 = vld [vmem:[%s0 + $0x8] sm:$0xff]
    %v44 = vld [vmem:[%s0 + $0x10] sm:$0xff]
    %v45 = vld [vmem:[%s0 + $0x18] sm:$0xff]
    %v46 = vld [vmem:[%s0 + $0x20] sm:$0xff]
    %v47 = vld [vmem:[%s0 + $0x28] sm:$0xff]
    %v48 = vld [vmem:[%s0 + $0x30] sm:$0xff]
    %v49 = vld [vmem:[%s0 + $0x38] sm:$0xff]
    %v50 = vld [vmem:[%s3] sm:$0xff]
    %v51 = vld [vmem:[%s3 + $0x8] sm:$0xff]
    %vm52 = vcmask 130048
    %v54 = vsel %vm52, %v42, 0
    %v57 = vsel %vm52, %v43, 0
    %v60 = vsel %vm52, %v44, 0
    %v63 = vsel %vm52, %v45, 0
    %v66 = vsel %vm52, %v46, 0
    %v69 = vsel %vm52, %v47, 0
    %v72 = vsel %vm52, %v48, 0
    %v75 = vsel %vm52, %v49, 0
    %77 = vmatprep.subr.mxu0 0.0
    %78 = vmatpush1.msra.mxu0 0.0
    %79 = vmatprep.subr.mxu0 0.0
    %80 = vmatpush1.msra.mxu0 0.0
    %81 = vmatprep.subr.mxu0 0.0
    %82 = vmatpush1.msra.mxu0 0.0
    %83 = vmatprep.subr.mxu0 0.0
    %84 = vmatpush1.msra.mxu0 0.0
    %85 = vmatprep.subr.mxu0 0.0
    %86 = vmatpush1.msra.mxu0 0.0
    %87 = vmatprep.subr.mxu0 0.0
    %88 = vmatpush1.msra.mxu0 0.0
    %89 = vmatprep.subr.mxu0 0.0
    %90 = vmatpush1.msra.mxu0 0.0
    %91 = vmatprep.subr.mxu0 0.0
    %92 = vmatpush1.msra.mxu0 0.0
    %93 = vmatprep.subr.mxu0 0.0
    %94 = vmatpush1.msra.mxu0 0.0
    %95 = vmatprep.subr.mxu0 0.0
    %96 = vmatpush1.msra.mxu0 0.0
    %97 = vmatprep.subr.mxu0 0.0
    %98 = vmatpush1.msra.mxu0 0.0
    %99 = vmatprep.subr.mxu0 0.0
    %100 = vmatpush1.msra.mxu0 0.0
    %101 = vmatprep.subr.mxu0 0.0
    %102 = vmatpush1.msra.mxu0 0.0
    %103 = vmatprep.subr.mxu0 0.0
    %104 = vmatpush1.msra.mxu0 0.0
    %105 = vmatprep.subr.mxu0 0.0
    %106 = vmatpush1.msra.mxu0 %v51
    %107 = vmatprep.subr.mxu0 0.0
    %108 = vmatpush1.msra.mxu0 %v50
    %109 = vmatprep.subr.mxu0 0.0
    %110 = vmatpush2.msra.mxu0 0.0
    %111 = vmatprep.subr.mxu0 0.0
    %112 = vmatpush2.msra.mxu0 0.0
    %113 = vmatprep.subr.mxu0 0.0
    %114 = vmatpush2.msra.mxu0 0.0
    %115 = vmatprep.subr.mxu0 0.0
    %116 = vmatpush2.msra.mxu0 0.0
    %117 = vmatprep.subr.mxu0 0.0
    %118 = vmatpush2.msra.mxu0 0.0
    %119 = vmatprep.subr.mxu0 0.0
    %120 = vmatpush2.msra.mxu0 0.0
    %121 = vmatprep.subr.mxu0 0.0
    %122 = vmatpush2.msra.mxu0 0.0
    %123 = vmatprep.subr.mxu0 0.0
    %124 = vmatpush2.msra.mxu0 0.0
    %125 = vmatprep.subr.mxu0 0.0
    %126 = vmatpush2.msra.mxu0 0.0
    %127 = vmatprep.subr.mxu0 0.0
    %128 = vmatpush2.msra.mxu0 0.0
    %129 = vmatprep.subr.mxu0 0.0
    %130 = vmatpush2.msra.mxu0 0.0
    %131 = vmatprep.subr.mxu0 0.0
    %132 = vmatpush2.msra.mxu0 0.0
    %133 = vmatprep.subr.mxu0 0.0
    %134 = vmatpush2.msra.mxu0 0.0
    %135 = vmatprep.subr.mxu0 0.0
    %136 = vmatpush2.msra.mxu0 0.0
    %137 = vmatprep.subr.mxu0 0.0
    %138 = vmatpush2.msra.mxu0 0.0
    %139 = vmatprep.subr.mxu0 0.0
    %140 = vmatpush2.msra.mxu0 0.0
    %141 = vmatprep.mubr.f32.mxu0 0.0
    %142 = vmatmul.mubr.f32.gmra.mxu0 %v54
    %v143 = vpop.f32.mrf.mxu0
    %v144 = vadd.f32 0.0, %v143
    %v145 = vpop.f32.mrf.mxu0
    %146 = vmatprep.mubr.f32.mxu0 0.0
    %147 = vmatmul.mubr.f32.gmra.mxu0 %v57
    %v148 = vpop.f32.mrf.mxu0
    %v149 = vadd.f32 0.0, %v148
    %v150 = vpop.f32.mrf.mxu0
    %151 = vmatprep.mubr.f32.mxu0 0.0
    %152 = vmatmul.mubr.f32.gmra.mxu0 %v60
    %v153 = vpop.f32.mrf.mxu0
    %v154 = vadd.f32 0.0, %v153
    %v155 = vpop.f32.mrf.mxu0
    %156 = vmatprep.mubr.f32.mxu0 0.0
    %157 = vmatmul.mubr.f32.gmra.mxu0 %v63
    %v158 = vpop.f32.mrf.mxu0
    %v159 = vadd.f32 0.0, %v158
    %v160 = vpop.f32.mrf.mxu0
    %161 = vmatprep.mubr.f32.mxu0 0.0
    %162 = vmatmul.mubr.f32.gmra.mxu0 %v66
    %v163 = vpop.f32.mrf.mxu0
    %v164 = vadd.f32 0.0, %v163
    %v165 = vpop.f32.mrf.mxu0
    %166 = vmatprep.mubr.f32.mxu0 0.0
    %167 = vmatmul.mubr.f32.gmra.mxu0 %v69
    %v168 = vpop.f32.mrf.mxu0
    %v169 = vadd.f32 0.0, %v168
    %v170 = vpop.f32.mrf.mxu0
    %171 = vmatprep.mubr.f32.mxu0 0.0
    %172 = vmatmul.mubr.f32.gmra.mxu0 %v72
    %v173 = vpop.f32.mrf.mxu0
    %v174 = vadd.f32 0.0, %v173
    %v175 = vpop.f32.mrf.mxu0
    %176 = vmatprep.mubr.f32.mxu0 0.0
    %177 = vmatmul.mubr.f32.gmra.mxu0 %v75
    %v178 = vpop.f32.mrf.mxu0
    %v179 = vadd.f32 0.0, %v178
    %v180 = vpop.f32.mrf.mxu0
    %181 = vdwg.mxu0
    %v182 = vld [vmem:[%s4] sm:$0x1]
    %v184 = vlaneseq
    %v185 = vshrl.u32 %v184, 7
    %v186 = vsub.s32 0, %v185
    %v187 = vrot.slane %v182, %v186
    %v189 = vadd.f32 %v144, %v187
    %v190 = vadd.f32 %v154, %v187
    %v191 = vadd.f32 %v164, %v187
    %v192 = vadd.f32 %v174, %v187
    %v193 = vmul.f32 %v189, 0.35355338
    %v194 = vmul.f32 %v190, 0.35355338
    %v195 = vmul.f32 %v191, 0.35355338
    %v196 = vmul.f32 %v192, 0.35355338
    %v197 = vld [vmem:[#allocation2] sm:$0x1]
    %v199 = vlaneseq
    %v200 = vshrl.u32 %v199, 7
    %v201 = vsub.s32 0, %v200
    %v202 = vrot.slane %v197, %v201
    %203 = vrot.lane.b32.xlu0 %v202, 16
    %v204 = vpop.permute.xlu0 %203
    %v206 = vadd.f32 %v149, %v204
    %v207 = vadd.f32 %v159, %v204
    %v208 = vadd.f32 %v169, %v204
    %v209 = vadd.f32 %v179, %v204
    %v210 = vld [vmem:[%s1] sm:$0xff]
    %v211 = vld [vmem:[%s1 + $0x8] sm:$0xff]
    %v212 = vld [vmem:[%s1 + $0x10] sm:$0xff]
    %v213 = vld [vmem:[%s1 + $0x18] sm:$0xff]
    %v214 = vld [vmem:[%s2] sm:$0xff]
    %v215 = vld [vmem:[%s2 + $0x8] sm:$0xff]
    %v216 = vld [vmem:[%s2 + $0x10] sm:$0xff]
    %v217 = vld [vmem:[%s2 + $0x18] sm:$0xff]
    %v218 = vmul.f32 %v214, %v210
    %v219 = vmul.f32 %v215, %v211
    %v220 = vmul.f32 %v216, %v212
    %v221 = vmul.f32 %v217, %v213
    %226 = vrot.lane.b32.xlu0 %v214, 4
    %v227 = vpop.permute.xlu0 %226
    %228 = vrot.lane.b32.xlu0 %v215, 4
    %v229 = vpop.permute.xlu0 %228
    %230 = vrot.lane.b32.xlu0 %v216, 4
    %v231 = vpop.permute.xlu0 %230
    %232 = vrot.lane.b32.xlu0 %v217, 4
    %v233 = vpop.permute.xlu0 %232
    %vm238 = vcmask 31744
    %v239 = vsel %vm238, %v218, %v227
    %v240 = vsel %vm238, %v219, %v229
    %v241 = vsel %vm238, %v220, %v231
    %v242 = vsel %vm238, %v221, %v233
    %v243 = vsel %vm238, %v210, 0.0
    %v244 = vrot.slane %v243, 4
    %v245 = vadd.f32 %v243, %v244
    %v246 = vrot.slane %v245, 2
    %v247 = vadd.f32 %v245, %v246
    %v248 = vrot.slane %v247, 1
    %v249 = vadd.f32 %v247, %v248
    %v250 = vsel %vm238, %v211, 0.0
    %v251 = vrot.slane %v250, 4
    %v252 = vadd.f32 %v250, %v251
    %v253 = vrot.slane %v252, 2
    %v254 = vadd.f32 %v252, %v253
    %v255 = vrot.slane %v254, 1
    %v256 = vadd.f32 %v254, %v255
    %v257 = vsel %vm238, %v212, 0.0
    %v258 = vrot.slane %v257, 4
    %v259 = vadd.f32 %v257, %v258
    %v260 = vrot.slane %v259, 2
    %v261 = vadd.f32 %v259, %v260
    %v262 = vrot.slane %v261, 1
    %v263 = vadd.f32 %v261, %v262
    %v264 = vsel %vm238, %v213, 0.0
    %v265 = vrot.slane %v264, 4
    %v266 = vadd.f32 %v264, %v265
    %v267 = vrot.slane %v266, 2
    %v268 = vadd.f32 %v266, %v267
    %v269 = vrot.slane %v268, 1
    %v270 = vadd.f32 %v268, %v269
    %v271 = vrcp.pop 8.0
    %v272 = vmul.f32 %v249, %v271
    %v273 = vmul.f32 %v256, %v271
    %v274 = vmul.f32 %v263, %v271
    %v275 = vmul.f32 %v270, %v271
    %277 = vrot.lane.b32.xlu0 %v206, 112
    %v278 = vpop.permute.xlu0 %277
    %vm279 = vcmask 64512
    %v281 = vsel %vm279, %v193, 0
    %v283 = vsel %vm279, %v278, 0
    %285 = vmatprep.subr.mxu0 0.0
    %286 = vmatpush1.xpose.msra.mxu0 0.0
    %287 = vmatprep.subr.mxu0 0.0
    %288 = vmatpush1.xpose.msra.mxu0 0.0
    %289 = vmatprep.subr.mxu0 0.0
    %290 = vmatpush1.xpose.msra.mxu0 0.0
    %291 = vmatprep.subr.mxu0 0.0
    %292 = vmatpush1.xpose.msra.mxu0 0.0
    %293 = vmatprep.subr.mxu0 0.0
    %294 = vmatpush1.xpose.msra.mxu0 0.0
    %295 = vmatprep.subr.mxu0 0.0
    %296 = vmatpush1.xpose.msra.mxu0 0.0
    %297 = vmatprep.subr.mxu0 0.0
    %298 = vmatpush1.xpose.msra.mxu0 0.0
    %299 = vmatprep.subr.mxu0 0.0
    %300 = vmatpush1.xpose.msra.mxu0 0.0
    %301 = vmatprep.subr.mxu0 0.0
    %302 = vmatpush1.xpose.msra.mxu0 0.0
    %303 = vmatprep.subr.mxu0 0.0
    %304 = vmatpush1.xpose.msra.mxu0 0.0
    %305 = vmatprep.subr.mxu0 0.0
    %306 = vmatpush1.xpose.msra.mxu0 0.0
    %307 = vmatprep.subr.mxu0 0.0
    %308 = vmatpush1.xpose.msra.mxu0 0.0
    %309 = vmatprep.subr.mxu0 0.0
    %310 = vmatpush1.xpose.msra.mxu0 0.0
    %311 = vmatprep.subr.mxu0 0.0
    %312 = vmatpush1.xpose.msra.mxu0 0.0
    %313 = vmatprep.subr.mxu0 0.0
    %314 = vmatpush1.xpose.msra.mxu0 0.0
    %315 = vmatprep.subr.mxu0 0.0
    %316 = vmatpush1.xpose.msra.mxu0 %v283
    %317 = vmatprep.subr.mxu0 0.0
    %318 = vmatpush2.xpose.msra.mxu0 0.0
    %319 = vmatprep.subr.mxu0 0.0
    %320 = vmatpush2.xpose.msra.mxu0 0.0
    %321 = vmatprep.subr.mxu0 0.0
    %322 = vmatpush2.xpose.msra.mxu0 0.0
    %323 = vmatprep.subr.mxu0 0.0
    %324 = vmatpush2.xpose.msra.mxu0 0.0
    %325 = vmatprep.subr.mxu0 0.0
    %326 = vmatpush2.xpose.msra.mxu0 0.0
    %327 = vmatprep.subr.mxu0 0.0
    %328 = vmatpush2.xpose.msra.mxu0 0.0
    %329 = vmatprep.subr.mxu0 0.0
    %330 = vmatpush2.xpose.msra.mxu0 0.0
    %331 = vmatprep.subr.mxu0 0.0
    %332 = vmatpush2.xpose.msra.mxu0 0.0
    %333 = vmatprep.subr.mxu0 0.0
    %334 = vmatpush2.xpose.msra.mxu0 0.0
    %335 = vmatprep.subr.mxu0 0.0
    %336 = vmatpush2.xpose.msra.mxu0 0.0
    %337 = vmatprep.subr.mxu0 0.0
    %338 = vmatpush2.xpose.msra.mxu0 0.0
    %339 = vmatprep.subr.mxu0 0.0
    %340 = vmatpush2.xpose.msra.mxu0 0.0
    %341 = vmatprep.subr.mxu0 0.0
    %342 = vmatpush2.xpose.msra.mxu0 0.0
    %343 = vmatprep.subr.mxu0 0.0
    %344 = vmatpush2.xpose.msra.mxu0 0.0
    %345 = vmatprep.subr.mxu0 0.0
    %346 = vmatpush2.xpose.msra.mxu0 0.0
    %347 = vmatprep.subr.mxu0 0.0
    %348 = vmatpush2.xpose.msra.mxu0 0.0
    %349 = vmatprep.mubr.f32.mxu0 0.0
    %350 = vmatmul.mubr.f32.gmra.mxu0 %v281
    %v351 = vpop.f32.mrf.mxu0
    %v352 = vadd.f32 0.0, %v351
    %v353 = vpop.f32.mrf.mxu0
    %354 = vdwg.mxu0
    %356 = vrot.lane.b32.xlu0 %v207, 112
    %v357 = vpop.permute.xlu0 %356
    %v359 = vsel %vm279, %v194, 0
    %v361 = vsel %vm279, %v357, 0
    %363 = vmatprep.subr.mxu0 0.0
    %364 = vmatpush1.xpose.msra.mxu0 0.0
    %365 = vmatprep.subr.mxu0 0.0
    %366 = vmatpush1.xpose.msra.mxu0 0.0
    %367 = vmatprep.subr.mxu0 0.0
    %368 = vmatpush1.xpose.msra.mxu0 0.0
    %369 = vmatprep.subr.mxu0 0.0
    %370 = vmatpush1.xpose.msra.mxu0 0.0
    %371 = vmatprep.subr.mxu0 0.0
    %372 = vmatpush1.xpose.msra.mxu0 0.0
    %373 = vmatprep.subr.mxu0 0.0
    %374 = vmatpush1.xpose.msra.mxu0 0.0
    %375 = vmatprep.subr.mxu0 0.0
    %376 = vmatpush1.xpose.msra.mxu0 0.0
    %377 = vmatprep.subr.mxu0 0.0
    %378 = vmatpush1.xpose.msra.mxu0 0.0
    %379 = vmatprep.subr.mxu0 0.0
    %380 = vmatpush1.xpose.msra.mxu0 0.0
    %381 = vmatprep.subr.mxu0 0.0
    %382 = vmatpush1.xpose.msra.mxu0 0.0
    %383 = vmatprep.subr.mxu0 0.0
    %384 = vmatpush1.xpose.msra.mxu0 0.0
    %385 = vmatprep.subr.mxu0 0.0
    %386 = vmatpush1.xpose.msra.mxu0 0.0
    %387 = vmatprep.subr.mxu0 0.0
    %388 = vmatpush1.xpose.msra.mxu0 0.0
    %389 = vmatprep.subr.mxu0 0.0
    %390 = vmatpush1.xpose.msra.mxu0 0.0
    %391 = vmatprep.subr.mxu0 0.0
    %392 = vmatpush1.xpose.msra.mxu0 0.0
    %393 = vmatprep.subr.mxu0 0.0
    %394 = vmatpush1.xpose.msra.mxu0 %v361
    %395 = vmatprep.subr.mxu0 0.0
    %396 = vmatpush2.xpose.msra.mxu0 0.0
    %397 = vmatprep.subr.mxu0 0.0
    %398 = vmatpush2.xpose.msra.mxu0 0.0
    %399 = vmatprep.subr.mxu0 0.0
    %400 = vmatpush2.xpose.msra.mxu0 0.0
    %401 = vmatprep.subr.mxu0 0.0
    %402 = vmatpush2.xpose.msra.mxu0 0.0
    %403 = vmatprep.subr.mxu0 0.0
    %404 = vmatpush2.xpose.msra.mxu0 0.0
    %405 = vmatprep.subr.mxu0 0.0
    %406 = vmatpush2.xpose.msra.mxu0 0.0
    %407 = vmatprep.subr.mxu0 0.0
    %408 = vmatpush2.xpose.msra.mxu0 0.0
    %409 = vmatprep.subr.mxu0 0.0
    %410 = vmatpush2.xpose.msra.mxu0 0.0
    %411 = vmatprep.subr.mxu0 0.0
    %412 = vmatpush2.xpose.msra.mxu0 0.0
    %413 = vmatprep.subr.mxu0 0.0
    %414 = vmatpush2.xpose.msra.mxu0 0.0
    %415 = vmatprep.subr.mxu0 0.0
    %416 = vmatpush2.xpose.msra.mxu0 0.0
    %417 = vmatprep.subr.mxu0 0.0
    %418 = vmatpush2.xpose.msra.mxu0 0.0
    %419 = vmatprep.subr.mxu0 0.0
    %420 = vmatpush2.xpose.msra.mxu0 0.0
    %421 = vmatprep.subr.mxu0 0.0
    %422 = vmatpush2.xpose.msra.mxu0 0.0
    %423 = vmatprep.subr.mxu0 0.0
    %424 = vmatpush2.xpose.msra.mxu0 0.0
    %425 = vmatprep.subr.mxu0 0.0
    %426 = vmatpush2.xpose.msra.mxu0 0.0
    %427 = vmatprep.mubr.f32.mxu0 0.0
    %428 = vmatmul.mubr.f32.gmra.mxu0 %v359
    %v429 = vpop.f32.mrf.mxu0
    %v430 = vadd.f32 0.0, %v429
    %v431 = vpop.f32.mrf.mxu0
    %432 = vdwg.mxu0
    %434 = vrot.lane.b32.xlu0 %v208, 112
    %v435 = vpop.permute.xlu0 %434
    %v437 = vsel %vm279, %v195, 0
    %v439 = vsel %vm279, %v435, 0
    %441 = vmatprep.subr.mxu0 0.0
    %442 = vmatpush1.xpose.msra.mxu0 0.0
    %443 = vmatprep.subr.mxu0 0.0
    %444 = vmatpush1.xpose.msra.mxu0 0.0
    %445 = vmatprep.subr.mxu0 0.0
    %446 = vmatpush1.xpose.msra.mxu0 0.0
    %447 = vmatprep.subr.mxu0 0.0
    %448 = vmatpush1.xpose.msra.mxu0 0.0
    %449 = vmatprep.subr.mxu0 0.0
    %450 = vmatpush1.xpose.msra.mxu0 0.0
    %451 = vmatprep.subr.mxu0 0.0
    %452 = vmatpush1.xpose.msra.mxu0 0.0
    %453 = vmatprep.subr.mxu0 0.0
    %454 = vmatpush1.xpose.msra.mxu0 0.0
    %455 = vmatprep.subr.mxu0 0.0
    %456 = vmatpush1.xpose.msra.mxu0 0.0
    %457 = vmatprep.subr.mxu0 0.0
    %458 = vmatpush1.xpose.msra.mxu0 0.0
    %459 = vmatprep.subr.mxu0 0.0
    %460 = vmatpush1.xpose.msra.mxu0 0.0
    %461 = vmatprep.subr.mxu0 0.0
    %462 = vmatpush1.xpose.msra.mxu0 0.0
    %463 = vmatprep.subr.mxu0 0.0
    %464 = vmatpush1.xpose.msra.mxu0 0.0
    %465 = vmatprep.subr.mxu0 0.0
    %466 = vmatpush1.xpose.msra.mxu0 0.0
    %467 = vmatprep.subr.mxu0 0.0
    %468 = vmatpush1.xpose.msra.mxu0 0.0
    %469 = vmatprep.subr.mxu0 0.0
    %470 = vmatpush1.xpose.msra.mxu0 0.0
    %471 = vmatprep.subr.mxu0 0.0
    %472 = vmatpush1.xpose.msra.mxu0 %v439
    %473 = vmatprep.subr.mxu0 0.0
    %474 = vmatpush2.xpose.msra.mxu0 0.0
    %475 = vmatprep.subr.mxu0 0.0
    %476 = vmatpush2.xpose.msra.mxu0 0.0
    %477 = vmatprep.subr.mxu0 0.0
    %478 = vmatpush2.xpose.msra.mxu0 0.0
    %479 = vmatprep.subr.mxu0 0.0
    %480 = vmatpush2.xpose.msra.mxu0 0.0
    %481 = vmatprep.subr.mxu0 0.0
    %482 = vmatpush2.xpose.msra.mxu0 0.0
    %483 = vmatprep.subr.mxu0 0.0
    %484 = vmatpush2.xpose.msra.mxu0 0.0
    %485 = vmatprep.subr.mxu0 0.0
    %486 = vmatpush2.xpose.msra.mxu0 0.0
    %487 = vmatprep.subr.mxu0 0.0
    %488 = vmatpush2.xpose.msra.mxu0 0.0
    %489 = vmatprep.subr.mxu0 0.0
    %490 = vmatpush2.xpose.msra.mxu0 0.0
    %491 = vmatprep.subr.mxu0 0.0
    %492 = vmatpush2.xpose.msra.mxu0 0.0
    %493 = vmatprep.subr.mxu0 0.0
    %494 = vmatpush2.xpose.msra.mxu0 0.0
    %495 = vmatprep.subr.mxu0 0.0
    %496 = vmatpush2.xpose.msra.mxu0 0.0
    %497 = vmatprep.subr.mxu0 0.0
    %498 = vmatpush2.xpose.msra.mxu0 0.0
    %499 = vmatprep.subr.mxu0 0.0
    %500 = vmatpush2.xpose.msra.mxu0 0.0
    %501 = vmatprep.subr.mxu0 0.0
    %502 = vmatpush2.xpose.msra.mxu0 0.0
    %503 = vmatprep.subr.mxu0 0.0
    %504 = vmatpush2.xpose.msra.mxu0 0.0
    %505 = vmatprep.mubr.f32.mxu0 0.0
    %506 = vmatmul.mubr.f32.gmra.mxu0 %v437
    %v507 = vpop.f32.mrf.mxu0
    %v508 = vadd.f32 0.0, %v507
    %v509 = vpop.f32.mrf.mxu0
    %510 = vdwg.mxu0
    %512 = vrot.lane.b32.xlu0 %v209, 112
    %v513 = vpop.permute.xlu0 %512
    %v515 = vsel %vm279, %v196, 0
    %v517 = vsel %vm279, %v513, 0
    %519 = vmatprep.subr.mxu0 0.0
    %520 = vmatpush1.xpose.msra.mxu0 0.0
    %521 = vmatprep.subr.mxu0 0.0
    %522 = vmatpush1.xpose.msra.mxu0 0.0
    %523 = vmatprep.subr.mxu0 0.0
    %524 = vmatpush1.xpose.msra.mxu0 0.0
    %525 = vmatprep.subr.mxu0 0.0
    %526 = vmatpush1.xpose.msra.mxu0 0.0
    %527 = vmatprep.subr.mxu0 0.0
    %528 = vmatpush1.xpose.msra.mxu0 0.0
    %529 = vmatprep.subr.mxu0 0.0
    %530 = vmatpush1.xpose.msra.mxu0 0.0
    %531 = vmatprep.subr.mxu0 0.0
    %532 = vmatpush1.xpose.msra.mxu0 0.0
    %533 = vmatprep.subr.mxu0 0.0
    %534 = vmatpush1.xpose.msra.mxu0 0.0
    %535 = vmatprep.subr.mxu0 0.0
    %536 = vmatpush1.xpose.msra.mxu0 0.0
    %537 = vmatprep.subr.mxu0 0.0
    %538 = vmatpush1.xpose.msra.mxu0 0.0
    %539 = vmatprep.subr.mxu0 0.0
    %540 = vmatpush1.xpose.msra.mxu0 0.0
    %541 = vmatprep.subr.mxu0 0.0
    %542 = vmatpush1.xpose.msra.mxu0 0.0
    %543 = vmatprep.subr.mxu0 0.0
    %544 = vmatpush1.xpose.msra.mxu0 0.0
    %545 = vmatprep.subr.mxu0 0.0
    %546 = vmatpush1.xpose.msra.mxu0 0.0
    %547 = vmatprep.subr.mxu0 0.0
    %548 = vmatpush1.xpose.msra.mxu0 0.0
    %549 = vmatprep.subr.mxu0 0.0
    %550 = vmatpush1.xpose.msra.mxu0 %v517
    %551 = vmatprep.subr.mxu0 0.0
    %552 = vmatpush2.xpose.msra.mxu0 0.0
    %553 = vmatprep.subr.mxu0 0.0
    %554 = vmatpush2.xpose.msra.mxu0 0.0
    %555 = vmatprep.subr.mxu0 0.0
    %556 = vmatpush2.xpose.msra.mxu0 0.0
    %557 = vmatprep.subr.mxu0 0.0
    %558 = vmatpush2.xpose.msra.mxu0 0.0
    %559 = vmatprep.subr.mxu0 0.0
    %560 = vmatpush2.xpose.msra.mxu0 0.0
    %561 = vmatprep.subr.mxu0 0.0
    %562 = vmatpush2.xpose.msra.mxu0 0.0
    %563 = vmatprep.subr.mxu0 0.0
    %564 = vmatpush2.xpose.msra.mxu0 0.0
    %565 = vmatprep.subr.mxu0 0.0
    %566 = vmatpush2.xpose.msra.mxu0 0.0
    %567 = vmatprep.subr.mxu0 0.0
    %568 = vmatpush2.xpose.msra.mxu0 0.0
    %569 = vmatprep.subr.mxu0 0.0
    %570 = vmatpush2.xpose.msra.mxu0 0.0
    %571 = vmatprep.subr.mxu0 0.0
    %572 = vmatpush2.xpose.msra.mxu0 0.0
    %573 = vmatprep.subr.mxu0 0.0
    %574 = vmatpush2.xpose.msra.mxu0 0.0
    %575 = vmatprep.subr.mxu0 0.0
    %576 = vmatpush2.xpose.msra.mxu0 0.0
    %577 = vmatprep.subr.mxu0 0.0
    %578 = vmatpush2.xpose.msra.mxu0 0.0
    %579 = vmatprep.subr.mxu0 0.0
    %580 = vmatpush2.xpose.msra.mxu0 0.0
    %581 = vmatprep.subr.mxu0 0.0
    %582 = vmatpush2.xpose.msra.mxu0 0.0
    %583 = vmatprep.mubr.f32.mxu0 0.0
    %584 = vmatmul.mubr.f32.gmra.mxu0 %v515
    %v585 = vpop.f32.mrf.mxu0
    %v586 = vadd.f32 0.0, %v585
    %v587 = vpop.f32.mrf.mxu0
    %588 = vdwg.mxu0
    %v589 = vsel %vm279, %v352, -inf
    %590 = vmax.xlane.f32.xlu0 %v589
    %v591 = vpop.xlane.xlu0 %590
    %v592 = vsel %vm279, %v430, -inf
    %593 = vmax.xlane.f32.xlu0 %v592
    %v594 = vpop.xlane.xlu0 %593
    %v595 = vsel %vm279, %v508, -inf
    %596 = vmax.xlane.f32.xlu0 %v595
    %v597 = vpop.xlane.xlu0 %596
    %v598 = vsel %vm279, %v586, -inf
    %599 = vmax.xlane.f32.xlu0 %v598
    %v600 = vpop.xlane.xlu0 %599
    %v601 = vsub.f32 %v352, %v591
    %v602 = vsub.f32 %v430, %v594
    %v603 = vsub.f32 %v508, %v597
    %v604 = vsub.f32 %v586, %v600
    %v605 = vmul.f32 %v601, 1.442695
    %v606 = vpow.pop %v605
    %v607 = vmul.f32 %v602, 1.442695
    %v608 = vpow.pop %v607
    %v609 = vmul.f32 %v603, 1.442695
    %v610 = vpow.pop %v609
    %v611 = vmul.f32 %v604, 1.442695
    %v612 = vpow.pop %v611
    %613 = vrot.lane.b32.xlu0 %v193, 120
    %v614 = vpop.permute.xlu0 %613
    %615 = vrot.lane.b32.xlu0 %v206, 104
    %v616 = vpop.permute.xlu0 %615
    %v617 = vsel %vm279, %v614, 0
    %v619 = vsel %vm279, %v616, 0
    %621 = vmatprep.subr.mxu0 0.0
    %622 = vmatpush1.xpose.msra.mxu0 0.0
    %623 = vmatprep.subr.mxu0 0.0
    %624 = vmatpush1.xpose.msra.mxu0 0.0
    %625 = vmatprep.subr.mxu0 0.0
    %626 = vmatpush1.xpose.msra.mxu0 0.0
    %627 = vmatprep.subr.mxu0 0.0
    %628 = vmatpush1.xpose.msra.mxu0 0.0
    %629 = vmatprep.subr.mxu0 0.0
    %630 = vmatpush1.xpose.msra.mxu0 0.0
    %631 = vmatprep.subr.mxu0 0.0
    %632 = vmatpush1.xpose.msra.mxu0 0.0
    %633 = vmatprep.subr.mxu0 0.0
    %634 = vmatpush1.xpose.msra.mxu0 0.0
    %635 = vmatprep.subr.mxu0 0.0
    %636 = vmatpush1.xpose.msra.mxu0 0.0
    %637 = vmatprep.subr.mxu0 0.0
    %638 = vmatpush1.xpose.msra.mxu0 0.0
    %639 = vmatprep.subr.mxu0 0.0
    %640 = vmatpush1.xpose.msra.mxu0 0.0
    %641 = vmatprep.subr.mxu0 0.0
    %642 = vmatpush1.xpose.msra.mxu0 0.0
    %643 = vmatprep.subr.mxu0 0.0
    %644 = vmatpush1.xpose.msra.mxu0 0.0
    %645 = vmatprep.subr.mxu0 0.0
    %646 = vmatpush1.xpose.msra.mxu0 0.0
    %647 = vmatprep.subr.mxu0 0.0
    %648 = vmatpush1.xpose.msra.mxu0 0.0
    %649 = vmatprep.subr.mxu0 0.0
    %650 = vmatpush1.xpose.msra.mxu0 0.0
    %651 = vmatprep.subr.mxu0 0.0
    %652 = vmatpush1.xpose.msra.mxu0 %v619
    %653 = vmatprep.subr.mxu0 0.0
    %654 = vmatpush2.xpose.msra.mxu0 0.0
    %655 = vmatprep.subr.mxu0 0.0
    %656 = vmatpush2.xpose.msra.mxu0 0.0
    %657 = vmatprep.subr.mxu0 0.0
    %658 = vmatpush2.xpose.msra.mxu0 0.0
    %659 = vmatprep.subr.mxu0 0.0
    %660 = vmatpush2.xpose.msra.mxu0 0.0
    %661 = vmatprep.subr.mxu0 0.0
    %662 = vmatpush2.xpose.msra.mxu0 0.0
    %663 = vmatprep.subr.mxu0 0.0
    %664 = vmatpush2.xpose.msra.mxu0 0.0
    %665 = vmatprep.subr.mxu0 0.0
    %666 = vmatpush2.xpose.msra.mxu0 0.0
    %667 = vmatprep.subr.mxu0 0.0
    %668 = vmatpush2.xpose.msra.mxu0 0.0
    %669 = vmatprep.subr.mxu0 0.0
    %670 = vmatpush2.xpose.msra.mxu0 0.0
    %671 = vmatprep.subr.mxu0 0.0
    %672 = vmatpush2.xpose.msra.mxu0 0.0
    %673 = vmatprep.subr.mxu0 0.0
    %674 = vmatpush2.xpose.msra.mxu0 0.0
    %675 = vmatprep.subr.mxu0 0.0
    %676 = vmatpush2.xpose.msra.mxu0 0.0
    %677 = vmatprep.subr.mxu0 0.0
    %678 = vmatpush2.xpose.msra.mxu0 0.0
    %679 = vmatprep.subr.mxu0 0.0
    %680 = vmatpush2.xpose.msra.mxu0 0.0
    %681 = vmatprep.subr.mxu0 0.0
    %682 = vmatpush2.xpose.msra.mxu0 0.0
    %683 = vmatprep.subr.mxu0 0.0
    %684 = vmatpush2.xpose.msra.mxu0 0.0
    %685 = vmatprep.mubr.f32.mxu0 0.0
    %686 = vmatmul.mubr.f32.gmra.mxu0 %v617
    %v687 = vpop.f32.mrf.mxu0
    %v688 = vadd.f32 0.0, %v687
    %v689 = vpop.f32.mrf.mxu0
    %690 = vdwg.mxu0
    %691 = vrot.lane.b32.xlu0 %v194, 120
    %v692 = vpop.permute.xlu0 %691
    %693 = vrot.lane.b32.xlu0 %v207, 104
    %v694 = vpop.permute.xlu0 %693
    %v695 = vsel %vm279, %v692, 0
    %v697 = vsel %vm279, %v694, 0
    %699 = vmatprep.subr.mxu0 0.0
    %700 = vmatpush1.xpose.msra.mxu0 0.0
    %701 = vmatprep.subr.mxu0 0.0
    %702 = vmatpush1.xpose.msra.mxu0 0.0
    %703 = vmatprep.subr.mxu0 0.0
    %704 = vmatpush1.xpose.msra.mxu0 0.0
    %705 = vmatprep.subr.mxu0 0.0
    %706 = vmatpush1.xpose.msra.mxu0 0.0
    %707 = vmatprep.subr.mxu0 0.0
    %708 = vmatpush1.xpose.msra.mxu0 0.0
    %709 = vmatprep.subr.mxu0 0.0
    %710 = vmatpush1.xpose.msra.mxu0 0.0
    %711 = vmatprep.subr.mxu0 0.0
    %712 = vmatpush1.xpose.msra.mxu0 0.0
    %713 = vmatprep.subr.mxu0 0.0
    %714 = vmatpush1.xpose.msra.mxu0 0.0
    %715 = vmatprep.subr.mxu0 0.0
    %716 = vmatpush1.xpose.msra.mxu0 0.0
    %717 = vmatprep.subr.mxu0 0.0
    %718 = vmatpush1.xpose.msra.mxu0 0.0
    %719 = vmatprep.subr.mxu0 0.0
    %720 = vmatpush1.xpose.msra.mxu0 0.0
    %721 = vmatprep.subr.mxu0 0.0
    %722 = vmatpush1.xpose.msra.mxu0 0.0
    %723 = vmatprep.subr.mxu0 0.0
    %724 = vmatpush1.xpose.msra.mxu0 0.0
    %725 = vmatprep.subr.mxu0 0.0
    %726 = vmatpush1.xpose.msra.mxu0 0.0
    %727 = vmatprep.subr.mxu0 0.0
    %728 = vmatpush1.xpose.msra.mxu0 0.0
    %729 = vmatprep.subr.mxu0 0.0
    %730 = vmatpush1.xpose.msra.mxu0 %v697
    %731 = vmatprep.subr.mxu0 0.0
    %732 = vmatpush2.xpose.msra.mxu0 0.0
    %733 = vmatprep.subr.mxu0 0.0
    %734 = vmatpush2.xpose.msra.mxu0 0.0
    %735 = vmatprep.subr.mxu0 0.0
    %736 = vmatpush2.xpose.msra.mxu0 0.0
    %737 = vmatprep.subr.mxu0 0.0
    %738 = vmatpush2.xpose.msra.mxu0 0.0
    %739 = vmatprep.subr.mxu0 0.0
    %740 = vmatpush2.xpose.msra.mxu0 0.0
    %741 = vmatprep.subr.mxu0 0.0
    %742 = vmatpush2.xpose.msra.mxu0 0.0
    %743 = vmatprep.subr.mxu0 0.0
    %744 = vmatpush2.xpose.msra.mxu0 0.0
    %745 = vmatprep.subr.mxu0 0.0
    %746 = vmatpush2.xpose.msra.mxu0 0.0
    %747 = vmatprep.subr.mxu0 0.0
    %748 = vmatpush2.xpose.msra.mxu0 0.0
    %749 = vmatprep.subr.mxu0 0.0
    %750 = vmatpush2.xpose.msra.mxu0 0.0
    %751 = vmatprep.subr.mxu0 0.0
    %752 = vmatpush2.xpose.msra.mxu0 0.0
    %753 = vmatprep.subr.mxu0 0.0
    %754 = vmatpush2.xpose.msra.mxu0 0.0
    %755 = vmatprep.subr.mxu0 0.0
    %756 = vmatpush2.xpose.msra.mxu0 0.0
    %757 = vmatprep.subr.mxu0 0.0
    %758 = vmatpush2.xpose.msra.mxu0 0.0
    %759 = vmatprep.subr.mxu0 0.0
    %760 = vmatpush2.xpose.msra.mxu0 0.0
    %761 = vmatprep.subr.mxu0 0.0
    %762 = vmatpush2.xpose.msra.mxu0 0.0
    %763 = vmatprep.mubr.f32.mxu0 0.0
    %764 = vmatmul.mubr.f32.gmra.mxu0 %v695
    %v765 = vpop.f32.mrf.mxu0
    %v766 = vadd.f32 0.0, %v765
    %v767 = vpop.f32.mrf.mxu0
    %768 = vdwg.mxu0
    %769 = vrot.lane.b32.xlu0 %v195, 120
    %v770 = vpop.permute.xlu0 %769
    %771 = vrot.lane.b32.xlu0 %v208, 104
    %v772 = vpop.permute.xlu0 %771
    %v773 = vsel %vm279, %v770, 0
    %v775 = vsel %vm279, %v772, 0
    %777 = vmatprep.subr.mxu0 0.0
    %778 = vmatpush1.xpose.msra.mxu0 0.0
    %779 = vmatprep.subr.mxu0 0.0
    %780 = vmatpush1.xpose.msra.mxu0 0.0
    %781 = vmatprep.subr.mxu0 0.0
    %782 = vmatpush1.xpose.msra.mxu0 0.0
    %783 = vmatprep.subr.mxu0 0.0
    %784 = vmatpush1.xpose.msra.mxu0 0.0
    %785 = vmatprep.subr.mxu0 0.0
    %786 = vmatpush1.xpose.msra.mxu0 0.0
    %787 = vmatprep.subr.mxu0 0.0
    %788 = vmatpush1.xpose.msra.mxu0 0.0
    %789 = vmatprep.subr.mxu0 0.0
    %790 = vmatpush1.xpose.msra.mxu0 0.0
    %791 = vmatprep.subr.mxu0 0.0
    %792 = vmatpush1.xpose.msra.mxu0 0.0
    %793 = vmatprep.subr.mxu0 0.0
    %794 = vmatpush1.xpose.msra.mxu0 0.0
    %795 = vmatprep.subr.mxu0 0.0
    %796 = vmatpush1.xpose.msra.mxu0 0.0
    %797 = vmatprep.subr.mxu0 0.0
    %798 = vmatpush1.xpose.msra.mxu0 0.0
    %799 = vmatprep.subr.mxu0 0.0
    %800 = vmatpush1.xpose.msra.mxu0 0.0
    %801 = vmatprep.subr.mxu0 0.0
    %802 = vmatpush1.xpose.msra.mxu0 0.0
    %803 = vmatprep.subr.mxu0 0.0
    %804 = vmatpush1.xpose.msra.mxu0 0.0
    %805 = vmatprep.subr.mxu0 0.0
    %806 = vmatpush1.xpose.msra.mxu0 0.0
    %807 = vmatprep.subr.mxu0 0.0
    %808 = vmatpush1.xpose.msra.mxu0 %v775
    %809 = vmatprep.subr.mxu0 0.0
    %810 = vmatpush2.xpose.msra.mxu0 0.0
    %811 = vmatprep.subr.mxu0 0.0
    %812 = vmatpush2.xpose.msra.mxu0 0.0
    %813 = vmatprep.subr.mxu0 0.0
    %814 = vmatpush2.xpose.msra.mxu0 0.0
    %815 = vmatprep.subr.mxu0 0.0
    %816 = vmatpush2.xpose.msra.mxu0 0.0
    %817 = vmatprep.subr.mxu0 0.0
    %818 = vmatpush2.xpose.msra.mxu0 0.0
    %819 = vmatprep.subr.mxu0 0.0
    %820 = vmatpush2.xpose.msra.mxu0 0.0
    %821 = vmatprep.subr.mxu0 0.0
    %822 = vmatpush2.xpose.msra.mxu0 0.0
    %823 = vmatprep.subr.mxu0 0.0
    %824 = vmatpush2.xpose.msra.mxu0 0.0
    %825 = vmatprep.subr.mxu0 0.0
    %826 = vmatpush2.xpose.msra.mxu0 0.0
    %827 = vmatprep.subr.mxu0 0.0
    %828 = vmatpush2.xpose.msra.mxu0 0.0
    %829 = vmatprep.subr.mxu0 0.0
    %830 = vmatpush2.xpose.msra.mxu0 0.0
    %831 = vmatprep.subr.mxu0 0.0
    %832 = vmatpush2.xpose.msra.mxu0 0.0
    %833 = vmatprep.subr.mxu0 0.0
    %834 = vmatpush2.xpose.msra.mxu0 0.0
    %835 = vmatprep.subr.mxu0 0.0
    %836 = vmatpush2.xpose.msra.mxu0 0.0
    %837 = vmatprep.subr.mxu0 0.0
    %838 = vmatpush2.xpose.msra.mxu0 0.0
    %839 = vmatprep.subr.mxu0 0.0
    %840 = vmatpush2.xpose.msra.mxu0 0.0
    %841 = vmatprep.mubr.f32.mxu0 0.0
    %842 = vmatmul.mubr.f32.gmra.mxu0 %v773
    %v843 = vpop.f32.mrf.mxu0
    %v844 = vadd.f32 0.0, %v843
    %v845 = vpop.f32.mrf.mxu0
    %846 = vdwg.mxu0
    %847 = vrot.lane.b32.xlu0 %v196, 120
    %v848 = vpop.permute.xlu0 %847
    %849 = vrot.lane.b32.xlu0 %v209, 104
    %v850 = vpop.permute.xlu0 %849
    %v851 = vsel %vm279, %v848, 0
    %v853 = vsel %vm279, %v850, 0
    %855 = vmatprep.subr.mxu0 0.0
    %856 = vmatpush1.xpose.msra.mxu0 0.0
    %857 = vmatprep.subr.mxu0 0.0
    %858 = vmatpush1.xpose.msra.mxu0 0.0
    %859 = vmatprep.subr.mxu0 0.0
    %860 = vmatpush1.xpose.msra.mxu0 0.0
    %861 = vmatprep.subr.mxu0 0.0
    %862 = vmatpush1.xpose.msra.mxu0 0.0
    %863 = vmatprep.subr.mxu0 0.0
    %864 = vmatpush1.xpose.msra.mxu0 0.0
    %865 = vmatprep.subr.mxu0 0.0
    %866 = vmatpush1.xpose.msra.mxu0 0.0
    %867 = vmatprep.subr.mxu0 0.0
    %868 = vmatpush1.xpose.msra.mxu0 0.0
    %869 = vmatprep.subr.mxu0 0.0
    %870 = vmatpush1.xpose.msra.mxu0 0.0
    %871 = vmatprep.subr.mxu0 0.0
    %872 = vmatpush1.xpose.msra.mxu0 0.0
    %873 = vmatprep.subr.mxu0 0.0
    %874 = vmatpush1.xpose.msra.mxu0 0.0
    %875 = vmatprep.subr.mxu0 0.0
    %876 = vmatpush1.xpose.msra.mxu0 0.0
    %877 = vmatprep.subr.mxu0 0.0
    %878 = vmatpush1.xpose.msra.mxu0 0.0
    %879 = vmatprep.subr.mxu0 0.0
    %880 = vmatpush1.xpose.msra.mxu0 0.0
    %881 = vmatprep.subr.mxu0 0.0
    %882 = vmatpush1.xpose.msra.mxu0 0.0
    %883 = vmatprep.subr.mxu0 0.0
    %884 = vmatpush1.xpose.msra.mxu0 0.0
    %885 = vmatprep.subr.mxu0 0.0
    %886 = vmatpush1.xpose.msra.mxu0 %v853
    %887 = vmatprep.subr.mxu0 0.0
    %888 = vmatpush2.xpose.msra.mxu0 0.0
    %889 = vmatprep.subr.mxu0 0.0
    %890 = vmatpush2.xpose.msra.mxu0 0.0
    %891 = vmatprep.subr.mxu0 0.0
    %892 = vmatpush2.xpose.msra.mxu0 0.0
    %893 = vmatprep.subr.mxu0 0.0
    %894 = vmatpush2.xpose.msra.mxu0 0.0
    %895 = vmatprep.subr.mxu0 0.0
    %896 = vmatpush2.xpose.msra.mxu0 0.0
    %897 = vmatprep.subr.mxu0 0.0
    %898 = vmatpush2.xpose.msra.mxu0 0.0
    %899 = vmatprep.subr.mxu0 0.0
    %900 = vmatpush2.xpose.msra.mxu0 0.0
    %901 = vmatprep.subr.mxu0 0.0
    %902 = vmatpush2.xpose.msra.mxu0 0.0
    %903 = vmatprep.subr.mxu0 0.0
    %904 = vmatpush2.xpose.msra.mxu0 0.0
    %905 = vmatprep.subr.mxu0 0.0
    %906 = vmatpush2.xpose.msra.mxu0 0.0
    %907 = vmatprep.subr.mxu0 0.0
    %908 = vmatpush2.xpose.msra.mxu0 0.0
    %909 = vmatprep.subr.mxu0 0.0
    %910 = vmatpush2.xpose.msra.mxu0 0.0
    %911 = vmatprep.subr.mxu0 0.0
    %912 = vmatpush2.xpose.msra.mxu0 0.0
    %913 = vmatprep.subr.mxu0 0.0
    %914 = vmatpush2.xpose.msra.mxu0 0.0
    %915 = vmatprep.subr.mxu0 0.0
    %916 = vmatpush2.xpose.msra.mxu0 0.0
    %917 = vmatprep.subr.mxu0 0.0
    %918 = vmatpush2.xpose.msra.mxu0 0.0
    %919 = vmatprep.mubr.f32.mxu0 0.0
    %920 = vmatmul.mubr.f32.gmra.mxu0 %v851
    %v921 = vpop.f32.mrf.mxu0
    %v922 = vadd.f32 0.0, %v921
    %v923 = vpop.f32.mrf.mxu0
    %924 = vdwg.mxu0
    %v925 = vsel %vm279, %v688, -inf
    %926 = vmax.xlane.f32.xlu0 %v925
    %v927 = vpop.xlane.xlu0 %926
    %v928 = vsel %vm279, %v766, -inf
    %929 = vmax.xlane.f32.xlu0 %v928
    %v930 = vpop.xlane.xlu0 %929
    %v931 = vsel %vm279, %v844, -inf
    %932 = vmax.xlane.f32.xlu0 %v931
    %v933 = vpop.xlane.xlu0 %932
    %v934 = vsel %vm279, %v922, -inf
    %935 = vmax.xlane.f32.xlu0 %v934
    %v936 = vpop.xlane.xlu0 %935
    %v937 = vsub.f32 %v688, %v927
    %v938 = vsub.f32 %v766, %v930
    %v939 = vsub.f32 %v844, %v933
    %v940 = vsub.f32 %v922, %v936
    %v941 = vmul.f32 %v937, 1.442695
    %v942 = vpow.pop %v941
    %v943 = vmul.f32 %v938, 1.442695
    %v944 = vpow.pop %v943
    %v945 = vmul.f32 %v939, 1.442695
    %v946 = vpow.pop %v945
    %v947 = vmul.f32 %v940, 1.442695
    %v948 = vpow.pop %v947
    %v950 = vsel %vm279, %v606, 0
    %v953 = vsel %vm279, %v942, 0
    %955 = vmatprep.subr.mxu0 0.0
    %956 = vmatpush1.msra.mxu0 0.0
    %957 = vmatprep.subr.mxu0 0.0
    %958 = vmatpush1.msra.mxu0 0.0
    %959 = vmatprep.subr.mxu0 0.0
    %960 = vmatpush1.msra.mxu0 0.0
    %961 = vmatprep.subr.mxu0 0.0
    %962 = vmatpush1.msra.mxu0 0.0
    %963 = vmatprep.subr.mxu0 0.0
    %964 = vmatpush1.msra.mxu0 0.0
    %965 = vmatprep.subr.mxu0 0.0
    %966 = vmatpush1.msra.mxu0 0.0
    %967 = vmatprep.subr.mxu0 0.0
    %968 = vmatpush1.msra.mxu0 0.0
    %969 = vmatprep.subr.mxu0 0.0
    %970 = vmatpush1.msra.mxu0 0.0
    %971 = vmatprep.subr.mxu0 0.0
    %972 = vmatpush1.msra.mxu0 0.0
    %973 = vmatprep.subr.mxu0 0.0
    %974 = vmatpush1.msra.mxu0 0.0
    %975 = vmatprep.subr.mxu0 0.0
    %976 = vmatpush1.msra.mxu0 0.0
    %977 = vmatprep.subr.mxu0 0.0
    %978 = vmatpush1.msra.mxu0 0.0
    %979 = vmatprep.subr.mxu0 0.0
    %980 = vmatpush1.msra.mxu0 0.0
    %981 = vmatprep.subr.mxu0 0.0
    %982 = vmatpush1.msra.mxu0 0.0
    %983 = vmatprep.subr.mxu0 0.0
    %984 = vmatpush1.msra.mxu0 0.0
    %985 = vmatprep.subr.mxu0 0.0
    %986 = vmatpush1.msra.mxu0 %v239
    %987 = vmatprep.subr.mxu0 0.0
    %988 = vmatpush2.msra.mxu0 0.0
    %989 = vmatprep.subr.mxu0 0.0
    %990 = vmatpush2.msra.mxu0 0.0
    %991 = vmatprep.subr.mxu0 0.0
    %992 = vmatpush2.msra.mxu0 0.0
    %993 = vmatprep.subr.mxu0 0.0
    %994 = vmatpush2.msra.mxu0 0.0
    %995 = vmatprep.subr.mxu0 0.0
    %996 = vmatpush2.msra.mxu0 0.0
    %997 = vmatprep.subr.mxu0 0.0
    %998 = vmatpush2.msra.mxu0 0.0
    %999 = vmatprep.subr.mxu0 0.0
    %1000 = vmatpush2.msra.mxu0 0.0
    %1001 = vmatprep.subr.mxu0 0.0
    %1002 = vmatpush2.msra.mxu0 0.0
    %1003 = vmatprep.subr.mxu0 0.0
    %1004 = vmatpush2.msra.mxu0 0.0
    %1005 = vmatprep.subr.mxu0 0.0
    %1006 = vmatpush2.msra.mxu0 0.0
    %1007 = vmatprep.subr.mxu0 0.0
    %1008 = vmatpush2.msra.mxu0 0.0
    %1009 = vmatprep.subr.mxu0 0.0
    %1010 = vmatpush2.msra.mxu0 0.0
    %1011 = vmatprep.subr.mxu0 0.0
    %1012 = vmatpush2.msra.mxu0 0.0
    %1013 = vmatprep.subr.mxu0 0.0
    %1014 = vmatpush2.msra.mxu0 0.0
    %1015 = vmatprep.subr.mxu0 0.0
    %1016 = vmatpush2.msra.mxu0 0.0
    %1017 = vmatprep.subr.mxu0 0.0
    %1018 = vmatpush2.msra.mxu0 0.0
    %1019 = vmatprep.mubr.f32.mxu0 0.0
    %1020 = vmatmul.mubr.f32.gmra.mxu0 %v950
    %v1021 = vpop.f32.mrf.mxu0
    %v1022 = vadd.f32 0.0, %v1021
    %v1023 = vpop.f32.mrf.mxu0
    %1024 = vmatprep.mubr.f32.mxu0 0.0
    %1025 = vmatmul.mubr.f32.gmra.mxu0 %v953
    %v1026 = vpop.f32.mrf.mxu0
    %v1027 = vadd.f32 0.0, %v1026
    %v1028 = vpop.f32.mrf.mxu0
    %1029 = vdwg.mxu0
    %v1031 = vsel %vm279, %v608, 0
    %v1034 = vsel %vm279, %v944, 0
    %1036 = vmatprep.subr.mxu0 0.0
    %1037 = vmatpush1.msra.mxu0 0.0
    %1038 = vmatprep.subr.mxu0 0.0
    %1039 = vmatpush1.msra.mxu0 0.0
    %1040 = vmatprep.subr.mxu0 0.0
    %1041 = vmatpush1.msra.mxu0 0.0
    %1042 = vmatprep.subr.mxu0 0.0
    %1043 = vmatpush1.msra.mxu0 0.0
    %1044 = vmatprep.subr.mxu0 0.0
    %1045 = vmatpush1.msra.mxu0 0.0
    %1046 = vmatprep.subr.mxu0 0.0
    %1047 = vmatpush1.msra.mxu0 0.0
    %1048 = vmatprep.subr.mxu0 0.0
    %1049 = vmatpush1.msra.mxu0 0.0
    %1050 = vmatprep.subr.mxu0 0.0
    %1051 = vmatpush1.msra.mxu0 0.0
    %1052 = vmatprep.subr.mxu0 0.0
    %1053 = vmatpush1.msra.mxu0 0.0
    %1054 = vmatprep.subr.mxu0 0.0
    %1055 = vmatpush1.msra.mxu0 0.0
    %1056 = vmatprep.subr.mxu0 0.0
    %1057 = vmatpush1.msra.mxu0 0.0
    %1058 = vmatprep.subr.mxu0 0.0
    %1059 = vmatpush1.msra.mxu0 0.0
    %1060 = vmatprep.subr.mxu0 0.0
    %1061 = vmatpush1.msra.mxu0 0.0
    %1062 = vmatprep.subr.mxu0 0.0
    %1063 = vmatpush1.msra.mxu0 0.0
    %1064 = vmatprep.subr.mxu0 0.0
    %1065 = vmatpush1.msra.mxu0 0.0
    %1066 = vmatprep.subr.mxu0 0.0
    %1067 = vmatpush1.msra.mxu0 %v240
    %1068 = vmatprep.subr.mxu0 0.0
    %1069 = vmatpush2.msra.mxu0 0.0
    %1070 = vmatprep.subr.mxu0 0.0
    %1071 = vmatpush2.msra.mxu0 0.0
    %1072 = vmatprep.subr.mxu0 0.0
    %1073 = vmatpush2.msra.mxu0 0.0
    %1074 = vmatprep.subr.mxu0 0.0
    %1075 = vmatpush2.msra.mxu0 0.0
    %1076 = vmatprep.subr.mxu0 0.0
    %1077 = vmatpush2.msra.mxu0 0.0
    %1078 = vmatprep.subr.mxu0 0.0
    %1079 = vmatpush2.msra.mxu0 0.0
    %1080 = vmatprep.subr.mxu0 0.0
    %1081 = vmatpush2.msra.mxu0 0.0
    %1082 = vmatprep.subr.mxu0 0.0
    %1083 = vmatpush2.msra.mxu0 0.0
    %1084 = vmatprep.subr.mxu0 0.0
    %1085 = vmatpush2.msra.mxu0 0.0
    %1086 = vmatprep.subr.mxu0 0.0
    %1087 = vmatpush2.msra.mxu0 0.0
    %1088 = vmatprep.subr.mxu0 0.0
    %1089 = vmatpush2.msra.mxu0 0.0
    %1090 = vmatprep.subr.mxu0 0.0
    %1091 = vmatpush2.msra.mxu0 0.0
    %1092 = vmatprep.subr.mxu0 0.0
    %1093 = vmatpush2.msra.mxu0 0.0
    %1094 = vmatprep.subr.mxu0 0.0
    %1095 = vmatpush2.msra.mxu0 0.0
    %1096 = vmatprep.subr.mxu0 0.0
    %1097 = vmatpush2.msra.mxu0 0.0
    %1098 = vmatprep.subr.mxu0 0.0
    %1099 = vmatpush2.msra.mxu0 0.0
    %1100 = vmatprep.mubr.f32.mxu0 0.0
    %1101 = vmatmul.mubr.f32.gmra.mxu0 %v1031
    %v1102 = vpop.f32.mrf.mxu0
    %v1103 = vadd.f32 0.0, %v1102
    %v1104 = vpop.f32.mrf.mxu0
    %1105 = vmatprep.mubr.f32.mxu0 0.0
    %1106 = vmatmul.mubr.f32.gmra.mxu0 %v1034
    %v1107 = vpop.f32.mrf.mxu0
    %v1108 = vadd.f32 0.0, %v1107
    %v1109 = vpop.f32.mrf.mxu0
    %1110 = vdwg.mxu0
    %v1112 = vsel %vm279, %v610, 0
    %v1115 = vsel %vm279, %v946, 0
    %1117 = vmatprep.subr.mxu0 0.0
    %1118 = vmatpush1.msra.mxu0 0.0
    %1119 = vmatprep.subr.mxu0 0.0
    %1120 = vmatpush1.msra.mxu0 0.0
    %1121 = vmatprep.subr.mxu0 0.0
    %1122 = vmatpush1.msra.mxu0 0.0
    %1123 = vmatprep.subr.mxu0 0.0
    %1124 = vmatpush1.msra.mxu0 0.0
    %1125 = vmatprep.subr.mxu0 0.0
    %1126 = vmatpush1.msra.mxu0 0.0
    %1127 = vmatprep.subr.mxu0 0.0
    %1128 = vmatpush1.msra.mxu0 0.0
    %1129 = vmatprep.subr.mxu0 0.0
    %1130 = vmatpush1.msra.mxu0 0.0
    %1131 = vmatprep.subr.mxu0 0.0
    %1132 = vmatpush1.msra.mxu0 0.0
    %1133 = vmatprep.subr.mxu0 0.0
    %1134 = vmatpush1.msra.mxu0 0.0
    %1135 = vmatprep.subr.mxu0 0.0
    %1136 = vmatpush1.msra.mxu0 0.0
    %1137 = vmatprep.subr.mxu0 0.0
    %1138 = vmatpush1.msra.mxu0 0.0
    %1139 = vmatprep.subr.mxu0 0.0
    %1140 = vmatpush1.msra.mxu0 0.0
    %1141 = vmatprep.subr.mxu0 0.0
    %1142 = vmatpush1.msra.mxu0 0.0
    %1143 = vmatprep.subr.mxu0 0.0
    %1144 = vmatpush1.msra.mxu0 0.0
    %1145 = vmatprep.subr.mxu0 0.0
    %1146 = vmatpush1.msra.mxu0 0.0
    %1147 = vmatprep.subr.mxu0 0.0
    %1148 = vmatpush1.msra.mxu0 %v241
    %1149 = vmatprep.subr.mxu0 0.0
    %1150 = vmatpush2.msra.mxu0 0.0
    %1151 = vmatprep.subr.mxu0 0.0
    %1152 = vmatpush2.msra.mxu0 0.0
    %1153 = vmatprep.subr.mxu0 0.0
    %1154 = vmatpush2.msra.mxu0 0.0
    %1155 = vmatprep.subr.mxu0 0.0
    %1156 = vmatpush2.msra.mxu0 0.0
    %1157 = vmatprep.subr.mxu0 0.0
    %1158 = vmatpush2.msra.mxu0 0.0
    %1159 = vmatprep.subr.mxu0 0.0
    %1160 = vmatpush2.msra.mxu0 0.0
    %1161 = vmatprep.subr.mxu0 0.0
    %1162 = vmatpush2.msra.mxu0 0.0
    %1163 = vmatprep.subr.mxu0 0.0
    %1164 = vmatpush2.msra.mxu0 0.0
    %1165 = vmatprep.subr.mxu0 0.0
    %1166 = vmatpush2.msra.mxu0 0.0
    %1167 = vmatprep.subr.mxu0 0.0
    %1168 = vmatpush2.msra.mxu0 0.0
    %1169 = vmatprep.subr.mxu0 0.0
    %1170 = vmatpush2.msra.mxu0 0.0
    %1171 = vmatprep.subr.mxu0 0.0
    %1172 = vmatpush2.msra.mxu0 0.0
    %1173 = vmatprep.subr.mxu0 0.0
    %1174 = vmatpush2.msra.mxu0 0.0
    %1175 = vmatprep.subr.mxu0 0.0
    %1176 = vmatpush2.msra.mxu0 0.0
    %1177 = vmatprep.subr.mxu0 0.0
    %1178 = vmatpush2.msra.mxu0 0.0
    %1179 = vmatprep.subr.mxu0 0.0
    %1180 = vmatpush2.msra.mxu0 0.0
    %1181 = vmatprep.mubr.f32.mxu0 0.0
    %1182 = vmatmul.mubr.f32.gmra.mxu0 %v1112
    %v1183 = vpop.f32.mrf.mxu0
    %v1184 = vadd.f32 0.0, %v1183
    %v1185 = vpop.f32.mrf.mxu0
    %1186 = vmatprep.mubr.f32.mxu0 0.0
    %1187 = vmatmul.mubr.f32.gmra.mxu0 %v1115
    %v1188 = vpop.f32.mrf.mxu0
    %v1189 = vadd.f32 0.0, %v1188
    %v1190 = vpop.f32.mrf.mxu0
    %1191 = vdwg.mxu0
    %v1193 = vsel %vm279, %v612, 0
    %v1196 = vsel %vm279, %v948, 0
    %1198 = vmatprep.subr.mxu0 0.0
    %1199 = vmatpush1.msra.mxu0 0.0
    %1200 = vmatprep.subr.mxu0 0.0
    %1201 = vmatpush1.msra.mxu0 0.0
    %1202 = vmatprep.subr.mxu0 0.0
    %1203 = vmatpush1.msra.mxu0 0.0
    %1204 = vmatprep.subr.mxu0 0.0
    %1205 = vmatpush1.msra.mxu0 0.0
    %1206 = vmatprep.subr.mxu0 0.0
    %1207 = vmatpush1.msra.mxu0 0.0
    %1208 = vmatprep.subr.mxu0 0.0
    %1209 = vmatpush1.msra.mxu0 0.0
    %1210 = vmatprep.subr.mxu0 0.0
    %1211 = vmatpush1.msra.mxu0 0.0
    %1212 = vmatprep.subr.mxu0 0.0
    %1213 = vmatpush1.msra.mxu0 0.0
    %1214 = vmatprep.subr.mxu0 0.0
    %1215 = vmatpush1.msra.mxu0 0.0
    %1216 = vmatprep.subr.mxu0 0.0
    %1217 = vmatpush1.msra.mxu0 0.0
    %1218 = vmatprep.subr.mxu0 0.0
    %1219 = vmatpush1.msra.mxu0 0.0
    %1220 = vmatprep.subr.mxu0 0.0
    %1221 = vmatpush1.msra.mxu0 0.0
    %1222 = vmatprep.subr.mxu0 0.0
    %1223 = vmatpush1.msra.mxu0 0.0
    %1224 = vmatprep.subr.mxu0 0.0
    %1225 = vmatpush1.msra.mxu0 0.0
    %1226 = vmatprep.subr.mxu0 0.0
    %1227 = vmatpush1.msra.mxu0 0.0
    %1228 = vmatprep.subr.mxu0 0.0
    %1229 = vmatpush1.msra.mxu0 %v242
    %1230 = vmatprep.subr.mxu0 0.0
    %1231 = vmatpush2.msra.mxu0 0.0
    %1232 = vmatprep.subr.mxu0 0.0
    %1233 = vmatpush2.msra.mxu0 0.0
    %1234 = vmatprep.subr.mxu0 0.0
    %1235 = vmatpush2.msra.mxu0 0.0
    %1236 = vmatprep.subr.mxu0 0.0
    %1237 = vmatpush2.msra.mxu0 0.0
    %1238 = vmatprep.subr.mxu0 0.0
    %1239 = vmatpush2.msra.mxu0 0.0
    %1240 = vmatprep.subr.mxu0 0.0
    %1241 = vmatpush2.msra.mxu0 0.0
    %1242 = vmatprep.subr.mxu0 0.0
    %1243 = vmatpush2.msra.mxu0 0.0
    %1244 = vmatprep.subr.mxu0 0.0
    %1245 = vmatpush2.msra.mxu0 0.0
    %1246 = vmatprep.subr.mxu0 0.0
    %1247 = vmatpush2.msra.mxu0 0.0
    %1248 = vmatprep.subr.mxu0 0.0
    %1249 = vmatpush2.msra.mxu0 0.0
    %1250 = vmatprep.subr.mxu0 0.0
    %1251 = vmatpush2.msra.mxu0 0.0
    %1252 = vmatprep.subr.mxu0 0.0
    %1253 = vmatpush2.msra.mxu0 0.0
    %1254 = vmatprep.subr.mxu0 0.0
    %1255 = vmatpush2.msra.mxu0 0.0
    %1256 = vmatprep.subr.mxu0 0.0
    %1257 = vmatpush2.msra.mxu0 0.0
    %1258 = vmatprep.subr.mxu0 0.0
    %1259 = vmatpush2.msra.mxu0 0.0
    %1260 = vmatprep.subr.mxu0 0.0
    %1261 = vmatpush2.msra.mxu0 0.0
    %1262 = vmatprep.mubr.f32.mxu0 0.0
    %1263 = vmatmul.mubr.f32.gmra.mxu0 %v1193
    %v1264 = vpop.f32.mrf.mxu0
    %v1265 = vadd.f32 0.0, %v1264
    %v1266 = vpop.f32.mrf.mxu0
    %1267 = vmatprep.mubr.f32.mxu0 0.0
    %1268 = vmatmul.mubr.f32.gmra.mxu0 %v1196
    %v1269 = vpop.f32.mrf.mxu0
    %v1270 = vadd.f32 0.0, %v1269
    %v1271 = vpop.f32.mrf.mxu0
    %1272 = vdwg.mxu0
    %vm1273 = vcmp.gt.f32.partialorder %v1022, 0.0
    %vm1274 = vcmp.gt.f32.partialorder %v1027, 0.0
    %vm1275 = vcmp.gt.f32.partialorder %v1103, 0.0
    %vm1276 = vcmp.gt.f32.partialorder %v1108, 0.0
    %vm1277 = vcmp.gt.f32.partialorder %v1184, 0.0
    %vm1278 = vcmp.gt.f32.partialorder %v1189, 0.0
    %vm1279 = vcmp.gt.f32.partialorder %v1265, 0.0
    %vm1280 = vcmp.gt.f32.partialorder %v1270, 0.0
    %v1281 = vsel %vm1273, %v1022, 1.0
    %v1282 = vsel %vm1274, %v1027, 1.0
    %v1283 = vsel %vm1275, %v1103, 1.0
    %v1284 = vsel %vm1276, %v1108, 1.0
    %v1285 = vsel %vm1277, %v1184, 1.0
    %v1286 = vsel %vm1278, %v1189, 1.0
    %v1287 = vsel %vm1279, %v1265, 1.0
    %v1288 = vsel %vm1280, %v1270, 1.0
    %v1289 = vrcp.pop %v1281
    %v1290 = vrcp.pop %v1282
    %v1291 = vrcp.pop %v1283
    %v1292 = vrcp.pop %v1284
    %v1293 = vrcp.pop %v1285
    %v1294 = vrcp.pop %v1286
    %v1295 = vrcp.pop %v1287
    %v1296 = vrcp.pop %v1288
    %1305 = vrot.lane.b32.xlu0 %v1289, 124
    %v1306 = vpop.permute.xlu0 %1305
    %1307 = vrot.lane.b32.xlu0 %v1290, 124
    %v1308 = vpop.permute.xlu0 %1307
    %1309 = vrot.lane.b32.xlu0 %v1291, 124
    %v1310 = vpop.permute.xlu0 %1309
    %1311 = vrot.lane.b32.xlu0 %v1292, 124
    %v1312 = vpop.permute.xlu0 %1311
    %1313 = vrot.lane.b32.xlu0 %v1293, 124
    %v1314 = vpop.permute.xlu0 %1313
    %1315 = vrot.lane.b32.xlu0 %v1294, 124
    %v1316 = vpop.permute.xlu0 %1315
    %1317 = vrot.lane.b32.xlu0 %v1295, 124
    %v1318 = vpop.permute.xlu0 %1317
    %1319 = vrot.lane.b32.xlu0 %v1296, 124
    %v1320 = vpop.permute.xlu0 %1319
    %v1329 = vmul.f32 %v1022, %v1306
    %v1330 = vmul.f32 %v1027, %v1308
    %v1331 = vmul.f32 %v1103, %v1310
    %v1332 = vmul.f32 %v1108, %v1312
    %v1333 = vmul.f32 %v1184, %v1314
    %v1334 = vmul.f32 %v1189, %v1316
    %v1335 = vmul.f32 %v1265, %v1318
    %v1336 = vmul.f32 %v1270, %v1320
    %1345 = vrot.lane.b32.xlu0 %v1329, 4
    %v1346 = vpop.permute.xlu0 %1345
    %1347 = vrot.lane.b32.xlu0 %v1330, 4
    %v1348 = vpop.permute.xlu0 %1347
    %1349 = vrot.lane.b32.xlu0 %v1331, 4
    %v1350 = vpop.permute.xlu0 %1349
    %1351 = vrot.lane.b32.xlu0 %v1332, 4
    %v1352 = vpop.permute.xlu0 %1351
    %1353 = vrot.lane.b32.xlu0 %v1333, 4
    %v1354 = vpop.permute.xlu0 %1353
    %1355 = vrot.lane.b32.xlu0 %v1334, 4
    %v1356 = vpop.permute.xlu0 %1355
    %1357 = vrot.lane.b32.xlu0 %v1335, 4
    %v1358 = vpop.permute.xlu0 %1357
    %1359 = vrot.lane.b32.xlu0 %v1336, 4
    %v1360 = vpop.permute.xlu0 %1359
    %1373 = vrot.lane.b32.xlu0 %v272, 4
    %v1374 = vpop.permute.xlu0 %1373
    %1375 = vrot.lane.b32.xlu0 %v273, 4
    %v1376 = vpop.permute.xlu0 %1375
    %1377 = vrot.lane.b32.xlu0 %v274, 4
    %v1378 = vpop.permute.xlu0 %1377
    %1379 = vrot.lane.b32.xlu0 %v275, 4
    %v1380 = vpop.permute.xlu0 %1379
    %v1385 = vsel %vm1273, %v1346, %v1374
    %v1386 = vsel %vm1274, %v1348, %v1374
    %v1387 = vsel %vm1275, %v1350, %v1376
    %v1388 = vsel %vm1276, %v1352, %v1376
    %v1389 = vsel %vm1277, %v1354, %v1378
    %v1390 = vsel %vm1278, %v1356, %v1378
    %v1391 = vsel %vm1279, %v1358, %v1380
    %v1392 = vsel %vm1280, %v1360, %v1380
    %v1393 = vld [vmem:[%s6] sm:$0xff]
    %1398 = vrot.lane.b32.xlu0 %v1386, 124
    %v1399 = vpop.permute.xlu0 %1398
    %1400 = vrot.lane.b32.xlu0 %v1388, 124
    %v1401 = vpop.permute.xlu0 %1400
    %1402 = vrot.lane.b32.xlu0 %v1390, 124
    %v1403 = vpop.permute.xlu0 %1402
    %1404 = vrot.lane.b32.xlu0 %v1392, 124
    %v1405 = vpop.permute.xlu0 %1404
    %v1407 = vrot.slane %v1393, 4
    %v1408 = vsel %vm238, %v1399, 0
    %v1410 = vsel %vm238, %v1401, 0
    %v1412 = vsel %vm238, %v1403, 0
    %v1414 = vsel %vm238, %v1405, 0
    %vm1416 = vcmask 1043456
    %v1417 = vsel %vm1416, %v1407, 0
    %1419 = vmatprep.subr.mxu0 0.0
    %1420 = vmatpush1.msra.mxu0 0.0
    %1421 = vmatprep.subr.mxu0 0.0
    %1422 = vmatpush1.msra.mxu0 0.0
    %1423 = vmatprep.subr.mxu0 0.0
    %1424 = vmatpush1.msra.mxu0 0.0
    %1425 = vmatprep.subr.mxu0 0.0
    %1426 = vmatpush1.msra.mxu0 0.0
    %1427 = vmatprep.subr.mxu0 0.0
    %1428 = vmatpush1.msra.mxu0 0.0
    %1429 = vmatprep.subr.mxu0 0.0
    %1430 = vmatpush1.msra.mxu0 0.0
    %1431 = vmatprep.subr.mxu0 0.0
    %1432 = vmatpush1.msra.mxu0 0.0
    %1433 = vmatprep.subr.mxu0 0.0
    %1434 = vmatpush1.msra.mxu0 0.0
    %1435 = vmatprep.subr.mxu0 0.0
    %1436 = vmatpush1.msra.mxu0 0.0
    %1437 = vmatprep.subr.mxu0 0.0
    %1438 = vmatpush1.msra.mxu0 0.0
    %1439 = vmatprep.subr.mxu0 0.0
    %1440 = vmatpush1.msra.mxu0 0.0
    %1441 = vmatprep.subr.mxu0 0.0
    %1442 = vmatpush1.msra.mxu0 0.0
    %1443 = vmatprep.subr.mxu0 0.0
    %1444 = vmatpush1.msra.mxu0 0.0
    %1445 = vmatprep.subr.mxu0 0.0
    %1446 = vmatpush1.msra.mxu0 0.0
    %1447 = vmatprep.subr.mxu0 0.0
    %1448 = vmatpush1.msra.mxu0 0.0
    %1449 = vmatprep.subr.mxu0 0.0
    %1450 = vmatpush1.msra.mxu0 %v1417
    %1451 = vmatprep.subr.mxu0 0.0
    %1452 = vmatpush2.msra.mxu0 0.0
    %1453 = vmatprep.subr.mxu0 0.0
    %1454 = vmatpush2.msra.mxu0 0.0
    %1455 = vmatprep.subr.mxu0 0.0
    %1456 = vmatpush2.msra.mxu0 0.0
    %1457 = vmatprep.subr.mxu0 0.0
    %1458 = vmatpush2.msra.mxu0 0.0
    %1459 = vmatprep.subr.mxu0 0.0
    %1460 = vmatpush2.msra.mxu0 0.0
    %1461 = vmatprep.subr.mxu0 0.0
    %1462 = vmatpush2.msra.mxu0 0.0
    %1463 = vmatprep.subr.mxu0 0.0
    %1464 = vmatpush2.msra.mxu0 0.0
    %1465 = vmatprep.subr.mxu0 0.0
    %1466 = vmatpush2.msra.mxu0 0.0
    %1467 = vmatprep.subr.mxu0 0.0
    %1468 = vmatpush2.msra.mxu0 0.0
    %1469 = vmatprep.subr.mxu0 0.0
    %1470 = vmatpush2.msra.mxu0 0.0
    %1471 = vmatprep.subr.mxu0 0.0
    %1472 = vmatpush2.msra.mxu0 0.0
    %1473 = vmatprep.subr.mxu0 0.0
    %1474 = vmatpush2.msra.mxu0 0.0
    %1475 = vmatprep.subr.mxu0 0.0
    %1476 = vmatpush2.msra.mxu0 0.0
    %1477 = vmatprep.subr.mxu0 0.0
    %1478 = vmatpush2.msra.mxu0 0.0
    %1479 = vmatprep.subr.mxu0 0.0
    %1480 = vmatpush2.msra.mxu0 0.0
    %1481 = vmatprep.subr.mxu0 0.0
    %1482 = vmatpush2.msra.mxu0 0.0
    %1483 = vmatprep.mubr.f32.mxu0 0.0
    %1484 = vmatmul.mubr.f32.gmra.mxu0 %v1408
    %v1485 = vpop.f32.mrf.mxu0
    %v1486 = vadd.f32 0.0, %v1485
    %v1487 = vpop.f32.mrf.mxu0
    %1488 = vmatprep.mubr.f32.mxu0 0.0
    %1489 = vmatmul.mubr.f32.gmra.mxu0 %v1410
    %v1490 = vpop.f32.mrf.mxu0
    %v1491 = vadd.f32 0.0, %v1490
    %v1492 = vpop.f32.mrf.mxu0
    %1493 = vmatprep.mubr.f32.mxu0 0.0
    %1494 = vmatmul.mubr.f32.gmra.mxu0 %v1412
    %v1495 = vpop.f32.mrf.mxu0
    %v1496 = vadd.f32 0.0, %v1495
    %v1497 = vpop.f32.mrf.mxu0
    %1498 = vmatprep.mubr.f32.mxu0 0.0
    %1499 = vmatmul.mubr.f32.gmra.mxu0 %v1414
    %v1500 = vpop.f32.mrf.mxu0
    %v1501 = vadd.f32 0.0, %v1500
    %v1502 = vpop.f32.mrf.mxu0
    %1503 = vdwg.mxu0
    %1508 = vrot.lane.b32.xlu0 %v1385, 124
    %v1509 = vpop.permute.xlu0 %1508
    %1510 = vrot.lane.b32.xlu0 %v1387, 124
    %v1511 = vpop.permute.xlu0 %1510
    %1512 = vrot.lane.b32.xlu0 %v1389, 124
    %v1513 = vpop.permute.xlu0 %1512
    %1514 = vrot.lane.b32.xlu0 %v1391, 124
    %v1515 = vpop.permute.xlu0 %1514
    %v1516 = vsel %vm238, %v1509, 0
    %v1518 = vsel %vm238, %v1511, 0
    %v1520 = vsel %vm238, %v1513, 0
    %v1522 = vsel %vm238, %v1515, 0
    %v1524 = vsel %vm1416, %v1393, 0
    %1526 = vmatprep.subr.mxu0 0.0
    %1527 = vmatpush1.msra.mxu0 0.0
    %1528 = vmatprep.subr.mxu0 0.0
    %1529 = vmatpush1.msra.mxu0 0.0
    %1530 = vmatprep.subr.mxu0 0.0
    %1531 = vmatpush1.msra.mxu0 0.0
    %1532 = vmatprep.subr.mxu0 0.0
    %1533 = vmatpush1.msra.mxu0 0.0
    %1534 = vmatprep.subr.mxu0 0.0
    %1535 = vmatpush1.msra.mxu0 0.0
    %1536 = vmatprep.subr.mxu0 0.0
    %1537 = vmatpush1.msra.mxu0 0.0
    %1538 = vmatprep.subr.mxu0 0.0
    %1539 = vmatpush1.msra.mxu0 0.0
    %1540 = vmatprep.subr.mxu0 0.0
    %1541 = vmatpush1.msra.mxu0 0.0
    %1542 = vmatprep.subr.mxu0 0.0
    %1543 = vmatpush1.msra.mxu0 0.0
    %1544 = vmatprep.subr.mxu0 0.0
    %1545 = vmatpush1.msra.mxu0 0.0
    %1546 = vmatprep.subr.mxu0 0.0
    %1547 = vmatpush1.msra.mxu0 0.0
    %1548 = vmatprep.subr.mxu0 0.0
    %1549 = vmatpush1.msra.mxu0 0.0
    %1550 = vmatprep.subr.mxu0 0.0
    %1551 = vmatpush1.msra.mxu0 0.0
    %1552 = vmatprep.subr.mxu0 0.0
    %1553 = vmatpush1.msra.mxu0 0.0
    %1554 = vmatprep.subr.mxu0 0.0
    %1555 = vmatpush1.msra.mxu0 0.0
    %1556 = vmatprep.subr.mxu0 0.0
    %1557 = vmatpush1.msra.mxu0 %v1524
    %1558 = vmatprep.subr.mxu0 0.0
    %1559 = vmatpush2.msra.mxu0 0.0
    %1560 = vmatprep.subr.mxu0 0.0
    %1561 = vmatpush2.msra.mxu0 0.0
    %1562 = vmatprep.subr.mxu0 0.0
    %1563 = vmatpush2.msra.mxu0 0.0
    %1564 = vmatprep.subr.mxu0 0.0
    %1565 = vmatpush2.msra.mxu0 0.0
    %1566 = vmatprep.subr.mxu0 0.0
    %1567 = vmatpush2.msra.mxu0 0.0
    %1568 = vmatprep.subr.mxu0 0.0
    %1569 = vmatpush2.msra.mxu0 0.0
    %1570 = vmatprep.subr.mxu0 0.0
    %1571 = vmatpush2.msra.mxu0 0.0
    %1572 = vmatprep.subr.mxu0 0.0
    %1573 = vmatpush2.msra.mxu0 0.0
    %1574 = vmatprep.subr.mxu0 0.0
    %1575 = vmatpush2.msra.mxu0 0.0
    %1576 = vmatprep.subr.mxu0 0.0
    %1577 = vmatpush2.msra.mxu0 0.0
    %1578 = vmatprep.subr.mxu0 0.0
    %1579 = vmatpush2.msra.mxu0 0.0
    %1580 = vmatprep.subr.mxu0 0.0
    %1581 = vmatpush2.msra.mxu0 0.0
    %1582 = vmatprep.subr.mxu0 0.0
    %1583 = vmatpush2.msra.mxu0 0.0
    %1584 = vmatprep.subr.mxu0 0.0
    %1585 = vmatpush2.msra.mxu0 0.0
    %1586 = vmatprep.subr.mxu0 0.0
    %1587 = vmatpush2.msra.mxu0 0.0
    %1588 = vmatprep.subr.mxu0 0.0
    %1589 = vmatpush2.msra.mxu0 0.0
    %1590 = vmatprep.mubr.f32.mxu0 0.0
    %1591 = vmatmul.mubr.f32.gmra.mxu0 %v1516
    %v1592 = vpop.f32.mrf.mxu0
    %v1593 = vadd.f32 %v1486, %v1592
    %v1594 = vpop.f32.mrf.mxu0
    %1595 = vmatprep.mubr.f32.mxu0 0.0
    %1596 = vmatmul.mubr.f32.gmra.mxu0 %v1518
    %v1597 = vpop.f32.mrf.mxu0
    %v1598 = vadd.f32 %v1491, %v1597
    %v1599 = vpop.f32.mrf.mxu0
    %1600 = vmatprep.mubr.f32.mxu0 0.0
    %1601 = vmatmul.mubr.f32.gmra.mxu0 %v1520
    %v1602 = vpop.f32.mrf.mxu0
    %v1603 = vadd.f32 %v1496, %v1602
    %v1604 = vpop.f32.mrf.mxu0
    %1605 = vmatprep.mubr.f32.mxu0 0.0
    %1606 = vmatmul.mubr.f32.gmra.mxu0 %v1522
    %v1607 = vpop.f32.mrf.mxu0
    %v1608 = vadd.f32 %v1501, %v1607
    %v1609 = vpop.f32.mrf.mxu0
    %1610 = vdwg.mxu0
    %v1611 = vld [vmem:[%s7] sm:$0x1]
    %v1613 = vlaneseq
    %v1614 = vshrl.u32 %v1613, 7
    %v1615 = vsub.s32 0, %v1614
    %v1616 = vrot.slane %v1611, %v1615
    %v1618 = vadd.f32 %v1593, %v1616
    %v1619 = vadd.f32 %v1598, %v1616
    %v1620 = vadd.f32 %v1603, %v1616
    %v1621 = vadd.f32 %v1608, %v1616
    %1622 = vst [vmem:[#allocation5] sm:$0xff] %v1618
    %1623 = vst [vmem:[#allocation5 + $0x8] sm:$0xff] %v1619
    %1624 = vst [vmem:[#allocation5 + $0x10] sm:$0xff] %v1620
    %1625 = vst [vmem:[#allocation5 + $0x18] sm:$0xff] %v1621
    // Predicated region
    $region38: #{tpu_custom_call.1} parent=1 // pred_check
      _
    $region39: #{tpu_custom_call.1} parent=1 // pred_check_branch
      %1627 = sbr.rel (0) target = $region41
    $region40: #{tpu_custom_call.1} parent=1 // pred_region
      %s1629 = ssub.s32 512, 512
      %1630 = vsyncadd [#allocation4], %s1629
      %s1631 = sshll.u32 [#allocation5], 4
      %s1632 = int_to_ptr.vmem [resolvable:$true] %s1631
      %1637 = dma.vmem_to_hbm [thread:$0]  %s1632, 512, %s8, [#allocation4], 128, 128, 8
    $region41: #{tpu_custom_call.1} parent=1 // pred_fallthru
      _
    // Predicated region
    $region42: #{tpu_custom_call.1} parent=1 // pred_check
      _
    $region43: #{tpu_custom_call.1} parent=1 // pred_check_branch
      %1639 = sbr.rel (0) target = $region45
    $region44: #{tpu_custom_call.1} parent=1 // pred_region
      %1640 = dma.done [#allocation4], 512
    $region45: #{tpu_custom_call.1} parent=1 // pred_fallthru
      _
    %1641 = vsyncpa [#allocation3], 1
    %1642 = vsyncpa [#allocation4], 1

</llo_original>
